<compile_context>
chip_gen: v5e
topology: v5e:2x2
jax: 0.10.0
libtpu: 0.0.40
codegen_flags: <defaults>
</compile_context>

<pallas_src>
import math

import jax
import jax.numpy as jnp
from jax.experimental import pallas as pl
from jax.experimental.pallas import tpu as pltpu


# --------------------------------------------------------------------- Pallas 3x3 conv
def key_projection(x_nchw, w_hwio, b):
    """y = Conv2d(x, w, b) with kernel 3x3, stride 1, padding 1 (PyTorch NCHW I/O)."""
    B, Cin, H, W = x_nchw.shape
    KH, KW, wcin, Cout = w_hwio.shape
    assert (KH, KW) == (3, 3) and wcin == Cin

    x_nhwc = jnp.transpose(x_nchw, (0, 2, 3, 1))      # lane-dense channels for the MXU
    w_mat = w_hwio.reshape(9 * Cin, Cout)             # row index = (dy*3+dx)*Cin + ci
    b_row = b.reshape(1, Cout)

    def kernel(x_ref, w_ref, b_ref, out_ref, xpad_sc, col_sc):
        # ---- zero-pad the input into a VMEM scratch (halo only; interior overwritten) ----
        zrow = jnp.zeros((1, W + 2, Cin), jnp.float32)
        xpad_sc[0:1, :, :] = zrow
        xpad_sc[H + 1:H + 2, :, :] = zrow
        zcol = jnp.zeros((H, 1, Cin), jnp.float32)
        xpad_sc[1:H + 1, 0:1, :] = zcol
        xpad_sc[1:H + 1, W + 1:W + 2, :] = zcol
        xpad_sc[1:H + 1, 1:W + 1, :] = x_ref[0].astype(jnp.float32)

        # ---- im2col: pack the 9 shifted windows along the lane-dense channel axis ----
        for dy in range(3):
            for dx in range(3):
                t = dy * 3 + dx
                col_sc[:, :, t * Cin:(t + 1) * Cin] = xpad_sc[dy:dy + H, dx:dx + W, :]

        # ---- single MXU matmul, K = 9*Cin, f32 accumulation, bias folded in once ----
        col = col_sc[...].reshape(H * W, 9 * Cin)
        acc = jnp.dot(col, w_ref[...], preferred_element_type=jnp.float32) + b_ref[...]
        out_ref[0] = acc.astype(out_ref.dtype)

    out = pl.pallas_call(
        kernel,
        out_shape=jax.ShapeDtypeStruct((B, H * W, Cout), x_nchw.dtype),
        grid=(B,),
        in_specs=[
            pl.BlockSpec((1, H, W, Cin), lambda bi: (bi, 0, 0, 0)),
            pl.BlockSpec((9 * Cin, Cout), lambda bi: (0, 0)),
            pl.BlockSpec((1, Cout), lambda bi: (0, 0)),
        ],
        out_specs=pl.BlockSpec((1, H * W, Cout), lambda bi: (bi, 0, 0)),
        scratch_shapes=[
            pltpu.VMEM((H + 2, W + 2, Cin), jnp.float32),   # zero-padded input
            pltpu.VMEM((H, W, 9 * Cin), jnp.float32),       # im2col slab
        ],
        compiler_params=pltpu.CompilerParams(dimension_semantics=("parallel",)),
    )(x_nhwc, w_mat, b_row)

    # (B, H*W, Cout) -> (B, Cout, H, W) to match PyTorch's NCHW output convention.
    return jnp.transpose(out, (0, 2, 1)).reshape(B, Cout, H, W)


# ------------------------------------------------------------------- pure-JAX reference
def key_projection_ref(x_nchw, w_hwio, b):
    x_nhwc = jnp.transpose(x_nchw, (0, 2, 3, 1))
    y = jax.lax.conv_general_dilated(
        x_nhwc, w_hwio, (1, 1), "SAME",
        dimension_numbers=("NHWC", "HWIO", "NHWC"),
        precision=jax.lax.Precision.HIGHEST)
    y = y + b.reshape(1, 1, 1, -1)
    return jnp.transpose(y, (0, 3, 1, 2))


if __name__ == "__main__":
    key = jax.random.PRNGKey(0)
    kx, kw, kb = jax.random.split(key, 3)

    # KeyProjection(indim, keydim): small but MXU/lane-friendly test shapes.
    B, indim, keydim, H, W = 2, 128, 64, 16, 16

    x = jax.random.normal(kx, (B, indim, H, W), jnp.float32)
    # The module uses orthogonal weight / zero bias init; init values do not change the
    # forward semantics, so use scaled-normal weight and a nonzero bias to exercise the
    # bias-add path.
    w = jax.random.normal(kw, (3, 3, indim, keydim), jnp.float32) * (1.0 / math.sqrt(9 * indim))
    b = jax.random.normal(kb, (keydim,), jnp.float32) * 0.05

    out = jax.block_until_ready(key_projection(x, w, b))
    assert out.shape == (B, keydim, H, W), out.shape

    ref = jax.block_until_ready(key_projection_ref(x, w, b))
    max_err = float(jnp.max(jnp.abs(out - ref)))
    if not bool(jnp.allclose(out, ref, atol=3e-4, rtol=3e-4)):
        raise AssertionError(f"Pallas output mismatch vs reference, max abs err={max_err}")

    print("KERNEL_OK")
</pallas_src>

<mosaic_0001>
module attributes {stable_mosaic.version = 11 : i64} {
  func.func @kernel(%arg0: i32, %arg1: memref<1x16x16x128xf32, #tpu.memory_space<vmem>>, %arg2: memref<1152x64xf32, #tpu.memory_space<vmem>>, %arg3: memref<1x64xf32, #tpu.memory_space<vmem>>, %arg4: memref<1x256x64xf32, #tpu.memory_space<vmem>>, %arg5: memref<18x18x128xf32, #tpu.memory_space<vmem>>, %arg6: memref<16x16x1152xf32, #tpu.memory_space<vmem>>) attributes {dimension_semantics = [#tpu.dimension_semantics<parallel>], iteration_bounds = array<i64: 2>, scalar_prefetch = 0 : i64, scratch_operands = 2 : i64, tpu.core_type = #tpu.core_type<tc>, window_params = [{transform_indices = @transform_0, window_bounds = array<i64: 1, 16, 16, 128>}, {pipeline_mode = #tpu.pipeline_mode<synchronous>, transform_indices = @transform_1, window_bounds = array<i64: 1152, 64>}, {pipeline_mode = #tpu.pipeline_mode<synchronous>, transform_indices = @transform_2, window_bounds = array<i64: 1, 64>}, {transform_indices = @transform_3, window_bounds = array<i64: 1, 256, 64>}]} {
    %cst = arith.constant 0.000000e+00 : f32
    %0 = vector.broadcast %cst : f32 to vector<1x18x128xf32>
    %c0 = arith.constant 0 : index
    %c0_0 = arith.constant 0 : index
    %c0_1 = arith.constant 0 : index
    %1 = vector.load %arg5[%c0, %c0_0, %c0_1] : memref<18x18x128xf32, #tpu.memory_space<vmem>>, vector<1x18x128xf32>
    tpu.vector_store %arg5[%c0, %c0_0, %c0_1], %0 {strides = array<i32>} : memref<18x18x128xf32, #tpu.memory_space<vmem>>, vector<1x18x128xf32>,
    %c17 = arith.constant 17 : index
    %c0_2 = arith.constant 0 : index
    %c0_3 = arith.constant 0 : index
    %2 = vector.load %arg5[%c17, %c0_2, %c0_3] : memref<18x18x128xf32, #tpu.memory_space<vmem>>, vector<1x18x128xf32>
    tpu.vector_store %arg5[%c17, %c0_2, %c0_3], %0 {strides = array<i32>} : memref<18x18x128xf32, #tpu.memory_space<vmem>>, vector<1x18x128xf32>,
    %cst_4 = arith.constant 0.000000e+00 : f32
    %3 = vector.broadcast %cst_4 : f32 to vector<16x1x128xf32>
    %c1 = arith.constant 1 : index
    %c0_5 = arith.constant 0 : index
    %c0_6 = arith.constant 0 : index
    %4 = vector.load %arg5[%c1, %c0_5, %c0_6] : memref<18x18x128xf32, #tpu.memory_space<vmem>>, vector<16x1x128xf32>
    tpu.vector_store %arg5[%c1, %c0_5, %c0_6], %3 {strides = array<i32>} : memref<18x18x128xf32, #tpu.memory_space<vmem>>, vector<16x1x128xf32>,
    %c1_7 = arith.constant 1 : index
    %c17_8 = arith.constant 17 : index
    %c0_9 = arith.constant 0 : index
    %5 = vector.load %arg5[%c1_7, %c17_8, %c0_9] : memref<18x18x128xf32, #tpu.memory_space<vmem>>, vector<16x1x128xf32>
    tpu.vector_store %arg5[%c1_7, %c17_8, %c0_9], %3 {strides = array<i32>} : memref<18x18x128xf32, #tpu.memory_space<vmem>>, vector<16x1x128xf32>,
    %c0_10 = arith.constant 0 : index
    %c0_11 = arith.constant 0 : index
    %c0_12 = arith.constant 0 : index
    %c0_13 = arith.constant 0 : index
    %6 = vector.load %arg1[%c0_10, %c0_11, %c0_12, %c0_13] : memref<1x16x16x128xf32, #tpu.memory_space<vmem>>, vector<1x16x16x128xf32>
    %7 = vector.shape_cast %6 : vector<1x16x16x128xf32> to vector<16x16x128xf32>
    %c1_14 = arith.constant 1 : index
    %c1_15 = arith.constant 1 : index
    %c0_16 = arith.constant 0 : index
    %8 = vector.load %arg5[%c1_14, %c1_15, %c0_16] : memref<18x18x128xf32, #tpu.memory_space<vmem>>, vector<16x16x128xf32>
    tpu.vector_store %arg5[%c1_14, %c1_15, %c0_16], %7 {strides = array<i32>} : memref<18x18x128xf32, #tpu.memory_space<vmem>>, vector<16x16x128xf32>,
    %c0_17 = arith.constant 0 : index
    %c0_18 = arith.constant 0 : index
    %c0_19 = arith.constant 0 : index
    %9 = vector.load %arg5[%c0_17, %c0_18, %c0_19] : memref<18x18x128xf32, #tpu.memory_space<vmem>>, vector<16x16x128xf32>
    %c0_20 = arith.constant 0 : index
    %c0_21 = arith.constant 0 : index
    %c0_22 = arith.constant 0 : index
    %10 = vector.load %arg6[%c0_20, %c0_21, %c0_22] : memref<16x16x1152xf32, #tpu.memory_space<vmem>>, vector<16x16x128xf32>
    tpu.vector_store %arg6[%c0_20, %c0_21, %c0_22], %9 {strides = array<i32>} : memref<16x16x1152xf32, #tpu.memory_space<vmem>>, vector<16x16x128xf32>,
    %c0_23 = arith.constant 0 : index
    %c1_24 = arith.constant 1 : index
    %c0_25 = arith.constant 0 : index
    %11 = vector.load %arg5[%c0_23, %c1_24, %c0_25] : memref<18x18x128xf32, #tpu.memory_space<vmem>>, vector<16x16x128xf32>
    %c0_26 = arith.constant 0 : index
    %c0_27 = arith.constant 0 : index
    %c128 = arith.constant 128 : index
    %12 = vector.load %arg6[%c0_26, %c0_27, %c128] : memref<16x16x1152xf32, #tpu.memory_space<vmem>>, vector<16x16x128xf32>
    tpu.vector_store %arg6[%c0_26, %c0_27, %c128], %11 {strides = array<i32>} : memref<16x16x1152xf32, #tpu.memory_space<vmem>>, vector<16x16x128xf32>,
    %c0_28 = arith.constant 0 : index
    %c2 = arith.constant 2 : index
    %c0_29 = arith.constant 0 : index
    %13 = vector.load %arg5[%c0_28, %c2, %c0_29] : memref<18x18x128xf32, #tpu.memory_space<vmem>>, vector<16x16x128xf32>
    %c0_30 = arith.constant 0 : index
    %c0_31 = arith.constant 0 : index
    %c256 = arith.constant 256 : index
    %14 = vector.load %arg6[%c0_30, %c0_31, %c256] : memref<16x16x1152xf32, #tpu.memory_space<vmem>>, vector<16x16x128xf32>
    tpu.vector_store %arg6[%c0_30, %c0_31, %c256], %13 {strides = array<i32>} : memref<16x16x1152xf32, #tpu.memory_space<vmem>>, vector<16x16x128xf32>,
    %c1_32 = arith.constant 1 : index
    %c0_33 = arith.constant 0 : index
    %c0_34 = arith.constant 0 : index
    %15 = vector.load %arg5[%c1_32, %c0_33, %c0_34] : memref<18x18x128xf32, #tpu.memory_space<vmem>>, vector<16x16x128xf32>
    %c0_35 = arith.constant 0 : index
    %c0_36 = arith.constant 0 : index
    %c384 = arith.constant 384 : index
    %16 = vector.load %arg6[%c0_35, %c0_36, %c384] : memref<16x16x1152xf32, #tpu.memory_space<vmem>>, vector<16x16x128xf32>
    tpu.vector_store %arg6[%c0_35, %c0_36, %c384], %15 {strides = array<i32>} : memref<16x16x1152xf32, #tpu.memory_space<vmem>>, vector<16x16x128xf32>,
    %c1_37 = arith.constant 1 : index
    %c1_38 = arith.constant 1 : index
    %c0_39 = arith.constant 0 : index
    %17 = vector.load %arg5[%c1_37, %c1_38, %c0_39] : memref<18x18x128xf32, #tpu.memory_space<vmem>>, vector<16x16x128xf32>
    %c0_40 = arith.constant 0 : index
    %c0_41 = arith.constant 0 : index
    %c512 = arith.constant 512 : index
    %18 = vector.load %arg6[%c0_40, %c0_41, %c512] : memref<16x16x1152xf32, #tpu.memory_space<vmem>>, vector<16x16x128xf32>
    tpu.vector_store %arg6[%c0_40, %c0_41, %c512], %17 {strides = array<i32>} : memref<16x16x1152xf32, #tpu.memory_space<vmem>>, vector<16x16x128xf32>,
    %c1_42 = arith.constant 1 : index
    %c2_43 = arith.constant 2 : index
    %c0_44 = arith.constant 0 : index
    %19 = vector.load %arg5[%c1_42, %c2_43, %c0_44] : memref<18x18x128xf32, #tpu.memory_space<vmem>>, vector<16x16x128xf32>
    %c0_45 = arith.constant 0 : index
    %c0_46 = arith.constant 0 : index
    %c640 = arith.constant 640 : index
    %20 = vector.load %arg6[%c0_45, %c0_46, %c640] : memref<16x16x1152xf32, #tpu.memory_space<vmem>>, vector<16x16x128xf32>
    tpu.vector_store %arg6[%c0_45, %c0_46, %c640], %19 {strides = array<i32>} : memref<16x16x1152xf32, #tpu.memory_space<vmem>>, vector<16x16x128xf32>,
    %c2_47 = arith.constant 2 : index
    %c0_48 = arith.constant 0 : index
    %c0_49 = arith.constant 0 : index
    %21 = vector.load %arg5[%c2_47, %c0_48, %c0_49] : memref<18x18x128xf32, #tpu.memory_space<vmem>>, vector<16x16x128xf32>
    %c0_50 = arith.constant 0 : index
    %c0_51 = arith.constant 0 : index
    %c768 = arith.constant 768 : index
    %22 = vector.load %arg6[%c0_50, %c0_51, %c768] : memref<16x16x1152xf32, #tpu.memory_space<vmem>>, vector<16x16x128xf32>
    tpu.vector_store %arg6[%c0_50, %c0_51, %c768], %21 {strides = array<i32>} : memref<16x16x1152xf32, #tpu.memory_space<vmem>>, vector<16x16x128xf32>,
    %c2_52 = arith.constant 2 : index
    %c1_53 = arith.constant 1 : index
    %c0_54 = arith.constant 0 : index
    %23 = vector.load %arg5[%c2_52, %c1_53, %c0_54] : memref<18x18x128xf32, #tpu.memory_space<vmem>>, vector<16x16x128xf32>
    %c0_55 = arith.constant 0 : index
    %c0_56 = arith.constant 0 : index
    %c896 = arith.constant 896 : index
    %24 = vector.load %arg6[%c0_55, %c0_56, %c896] : memref<16x16x1152xf32, #tpu.memory_space<vmem>>, vector<16x16x128xf32>
    tpu.vector_store %arg6[%c0_55, %c0_56, %c896], %23 {strides = array<i32>} : memref<16x16x1152xf32, #tpu.memory_space<vmem>>, vector<16x16x128xf32>,
    %c2_57 = arith.constant 2 : index
    %c2_58 = arith.constant 2 : index
    %c0_59 = arith.constant 0 : index
    %25 = vector.load %arg5[%c2_57, %c2_58, %c0_59] : memref<18x18x128xf32, #tpu.memory_space<vmem>>, vector<16x16x128xf32>
    %c0_60 = arith.constant 0 : index
    %c0_61 = arith.constant 0 : index
    %c1024 = arith.constant 1024 : index
    %26 = vector.load %arg6[%c0_60, %c0_61, %c1024] : memref<16x16x1152xf32, #tpu.memory_space<vmem>>, vector<16x16x128xf32>
    tpu.vector_store %arg6[%c0_60, %c0_61, %c1024], %25 {strides = array<i32>} : memref<16x16x1152xf32, #tpu.memory_space<vmem>>, vector<16x16x128xf32>,
    %c0_62 = arith.constant 0 : index
    %c0_63 = arith.constant 0 : index
    %c0_64 = arith.constant 0 : index
    %27 = vector.load %arg6[%c0_62, %c0_63, %c0_64] : memref<16x16x1152xf32, #tpu.memory_space<vmem>>, vector<16x16x1152xf32>
    %28 = vector.shape_cast %27 : vector<16x16x1152xf32> to vector<256x1152xf32>
    %c0_65 = arith.constant 0 : index
    %c0_66 = arith.constant 0 : index
    %29 = vector.load %arg2[%c0_65, %c0_66] : memref<1152x64xf32, #tpu.memory_space<vmem>>, vector<1152x64xf32>
    %cst_67 = arith.constant dense<0.000000e+00> : vector<256x64xf32>
    %30 = tpu.matmul %28, %29, %cst_67 {dimension_numbers = #tpu.dot_dimension_numbers<[1], [0], [0], [1], [0, 0, 1, 1], [], []>} : vector<256x1152xf32>, vector<1152x64xf32>, vector<256x64xf32> -> vector<256x64xf32>
    %c0_68 = arith.constant 0 : index
    %c0_69 = arith.constant 0 : index
    %31 = vector.load %arg3[%c0_68, %c0_69] : memref<1x64xf32, #tpu.memory_space<vmem>>, vector<1x64xf32>
    %32 = vector.broadcast %31 : vector<1x64xf32> to vector<256x64xf32>
    %33 = arith.addf %30, %32 : vector<256x64xf32>
    %c0_70 = arith.constant 0 : index
    %c0_71 = arith.constant 0 : index
    %c0_72 = arith.constant 0 : index
    %34 = vector.load %arg4[%c0_70, %c0_71, %c0_72] : memref<1x256x64xf32, #tpu.memory_space<vmem>>, vector<1x256x64xf32>
    %35 = vector.shape_cast %34 : vector<1x256x64xf32> to vector<256x64xf32>
    %36 = vector.shape_cast %33 : vector<256x64xf32> to vector<1x256x64xf32>
    tpu.vector_store %arg4[%c0_70, %c0_71, %c0_72], %36 {strides = array<i32>} : memref<1x256x64xf32, #tpu.memory_space<vmem>>, vector<1x256x64xf32>,
    return
  }
  func.func @transform_0(%arg0: i32) -> (i32, i32, i32, i32) {
    %c0_i32 = arith.constant 0 : i32
    %c0_i32_0 = arith.constant 0 : i32
    %c0_i32_1 = arith.constant 0 : i32
    %c0_i32_2 = arith.constant 0 : i32
    return %arg0, %c0_i32, %c0_i32_0, %c0_i32_1 : i32, i32, i32, i32
  }
  func.func @transform_1(%arg0: i32) -> (i32, i32) {
    %c0_i32 = arith.constant 0 : i32
    %c0_i32_0 = arith.constant 0 : i32
    %c0_i32_1 = arith.constant 0 : i32
    return %c0_i32, %c0_i32_0 : i32, i32
  }
  func.func @transform_2(%arg0: i32) -> (i32, i32) {
    %c0_i32 = arith.constant 0 : i32
    %c0_i32_0 = arith.constant 0 : i32
    %c0_i32_1 = arith.constant 0 : i32
    return %c0_i32, %c0_i32_0 : i32, i32
  }
  func.func @transform_3(%arg0: i32) -> (i32, i32, i32) {
    %c0_i32 = arith.constant 0 : i32
    %c0_i32_0 = arith.constant 0 : i32
    %c0_i32_1 = arith.constant 0 : i32
    return %arg0, %c0_i32, %c0_i32_0 : i32, i32, i32
  }
}

</mosaic_0001>

<llo_original>
// kernel: tpu_custom_call.1
$region0: #{tpu_custom_call.1}
  #allocation0 [shape = 'u32[]', space=smem, size = 0x4, offset = 0x4, fixed_abs, tag = 'smem constant byte address 0x4 - core index']
  #allocation1 [shape = 'u32[72,128]{1,0:T(1,128)}', space=vmem, size = 0x9000, scoped, tag = 'internal scratch']
  #allocation2 [shape = 'f32[18,18,128]{2,1,0:T(8,128)}', space=vmem, size = 0x36000, scoped, tag = 'scratch operand']
  #allocation3 [shape = 'f32[16,16,1152]{2,1,0:T(8,128)}', space=vmem, size = 0x120000, scoped, tag = 'scratch operand']
  %s0 = inlined_call_operand.vmem [shape: f32[2,16,16,128], index: 0, kind: input, shape index: {}]
  %s1 = inlined_call_operand.vmem [shape: f32[1152,64], index: 1, kind: input, shape index: {}]
  %s2 = inlined_call_operand.vmem [shape: f32[1,64], index: 2, kind: input, shape index: {}]
  %s3 = inlined_call_operand.vmem [shape: f32[2,256,64], index: 3, kind: output, shape index: {}]
  %s4 = sld [smem:[#allocation0]]
  $region45: #{tpu_custom_call.1} parent=0
    _
  %s6 = ssub.s32 1, %s4
  %s7 = scalar_select 0, %s6, %s4
  loop: start=0, step=1, limit=4
  $region2: #{tpu_custom_call.1} parent=0 // loop_pre_header
    _
  $region3: #{tpu_custom_call.1} parent=0 // loop_header
    %s9 = sphi 0, %s13
    %p10 = scmp.ge.s32.totalorder %s9, 4
    %s19 = sphi 0, %s21
    %s22 = sphi 0, %s19
    %s23 = sphi 0, %s22
    %s39 = sphi 0, %s23
    %s43 = sphi 0, %s43
    %s45 = sphi 0, %s43
    %s46 = sphi 0, %s45
    %s60 = sphi 0, %s46
    %s64 = sphi 0, %s64
    %s66 = sphi 0, %s64
    %s67 = sphi 0, %s66
    %s81 = sphi 0, %s67
    %s87 = sphi 0, %s89
    %s90 = sphi 0, %s87
    %s91 = sphi 0, %s90
    %s107 = sphi 0, %s91
  $region4: #{tpu_custom_call.1} parent=0 // loop_header_branch
    %12 = sbr.rel (%p10) target = $region8
  $region5: #{tpu_custom_call.1} parent=0 // loop_body
    %s14 = ssub.s32 %s9, 1
    %s15 = ssub.s32 %s9, 2
    %s16 = sadd.s32 %s9, 1
    %s17 = ssub.s32 %s9, %s16
    %p18 = scmp.eq.s32.totalorder %s17, 0
    %s20 = sadd.s32 %s19, 1
    %s21 = scalar_select %p18, %s19, %s20
    %p24 = pneg %p18
    %p25 = scmp.eq.s32.totalorder %s9, 1
    %p26 = por %p24, %p25
    %p27 = scmp.ne.s32.totalorder %s19, %s22
    %p28 = scmp.eq.s32.totalorder %s9, 0
    %p29 = por %p27, %p28
    %p30 = scmp.ne.s32.totalorder %s19, %s22
    %p31 = scmp.eq.s32.totalorder %s14, 1
    %p32 = por %p30, %p31
    %p33 = scmp.ne.s32.totalorder %s22, %s23
    %p34 = scmp.eq.s32.totalorder %s14, 0
    %p35 = por %p33, %p34
    %p36 = scmp.ne.s32.totalorder %s22, %s23
    %p37 = scmp.eq.s32.totalorder %s15, 1
    %p38 = por %p36, %p37
    %p40 = scmp.ne.s32.totalorder %s23, %s39
    %p41 = scmp.eq.s32.totalorder %s15, 0
    %p42 = por %p40, %p41
    %s44 = sadd.s32 %s43, 1
    %p47 = scmp.eq.s32.totalorder %s9, 1
    %p48 = scmp.ne.s32.totalorder %s43, %s45
    %p49 = scmp.eq.s32.totalorder %s9, 0
    %p50 = por %p48, %p49
    %p51 = scmp.ne.s32.totalorder %s43, %s45
    %p52 = scmp.eq.s32.totalorder %s14, 1
    %p53 = por %p51, %p52
    %p54 = scmp.ne.s32.totalorder %s45, %s46
    %p55 = scmp.eq.s32.totalorder %s14, 0
    %p56 = por %p54, %p55
    %p57 = scmp.ne.s32.totalorder %s45, %s46
    %p58 = scmp.eq.s32.totalorder %s15, 1
    %p59 = por %p57, %p58
    %p61 = scmp.ne.s32.totalorder %s46, %s60
    %p62 = scmp.eq.s32.totalorder %s15, 0
    %p63 = por %p61, %p62
    %s65 = sadd.s32 %s64, 1
    %p68 = scmp.eq.s32.totalorder %s9, 1
    %p69 = scmp.ne.s32.totalorder %s64, %s66
    %p70 = scmp.eq.s32.totalorder %s9, 0
    %p71 = por %p69, %p70
    %p72 = scmp.ne.s32.totalorder %s64, %s66
    %p73 = scmp.eq.s32.totalorder %s14, 1
    %p74 = por %p72, %p73
    %p75 = scmp.ne.s32.totalorder %s66, %s67
    %p76 = scmp.eq.s32.totalorder %s14, 0
    %p77 = por %p75, %p76
    %p78 = scmp.ne.s32.totalorder %s66, %s67
    %p79 = scmp.eq.s32.totalorder %s15, 1
    %p80 = por %p78, %p79
    %p82 = scmp.ne.s32.totalorder %s67, %s81
    %p83 = scmp.eq.s32.totalorder %s15, 0
    %p84 = por %p82, %p83
    %s85 = ssub.s32 %s9, %s16
    %p86 = scmp.eq.s32.totalorder %s85, 0
    %s88 = sadd.s32 %s87, 1
    %s89 = scalar_select %p86, %s87, %s88
    %p92 = pneg %p86
    %p93 = scmp.eq.s32.totalorder %s9, 1
    %p94 = por %p92, %p93
    %p95 = scmp.ne.s32.totalorder %s87, %s90
    %p96 = scmp.eq.s32.totalorder %s9, 0
    %p97 = por %p95, %p96
    %p98 = scmp.ne.s32.totalorder %s87, %s90
    %p99 = scmp.eq.s32.totalorder %s14, 1
    %p100 = por %p98, %p99
    %p101 = scmp.ne.s32.totalorder %s90, %s91
    %p102 = scmp.eq.s32.totalorder %s14, 0
    %p103 = por %p101, %p102
    %p104 = scmp.ne.s32.totalorder %s90, %s91
    %p105 = scmp.eq.s32.totalorder %s15, 1
    %p106 = por %p104, %p105
    %p108 = scmp.ne.s32.totalorder %s91, %s107
    %p109 = scmp.eq.s32.totalorder %s15, 0
    %p110 = por %p108, %p109
    %p111 = scmp.le.s32.totalorder 1, %s9
    %p112 = scmp.lt.s32.totalorder %s9, 3
    %p113 = pnand %p111, %p112
    %p114 = pneg %p113
    // Predicated region
    $region9: #{tpu_custom_call.1} parent=5 // pred_check
      _
    $region10: #{tpu_custom_call.1} parent=5 // pred_check_branch
      %116 = sbr.rel (%p113) target = $region12
    $region11: #{tpu_custom_call.1} parent=5 // pred_region
      %s117 = ssub.s32 %s9, 1
      // Predicated region
      $region13: #{tpu_custom_call.1} parent=11 // pred_check
        %p118 = pneg %p56
      $region14: #{tpu_custom_call.1} parent=11 // pred_check_branch
        %120 = sbr.rel (%p118) target = $region16
      $region15: #{tpu_custom_call.1} parent=11 // pred_region
        _
      $region16: #{tpu_custom_call.1} parent=11 // pred_fallthru
        _
      // Predicated region
      $region17: #{tpu_custom_call.1} parent=11 // pred_check
        %p121 = pneg %p77
      $region18: #{tpu_custom_call.1} parent=11 // pred_check_branch
        %123 = sbr.rel (%p121) target = $region20
      $region19: #{tpu_custom_call.1} parent=11 // pred_region
        _
      $region20: #{tpu_custom_call.1} parent=11 // pred_fallthru
        _
    $region12: #{tpu_custom_call.1} parent=5 // pred_fallthru
      _
    %p124 = scmp.lt.s32.totalorder %s9, 2
    // Predicated region
    $region21: #{tpu_custom_call.1} parent=5 // pred_check
      %p125 = pneg %p124
    $region22: #{tpu_custom_call.1} parent=5 // pred_check_branch
      %127 = sbr.rel (%p125) target = $region24
    $region23: #{tpu_custom_call.1} parent=5 // pred_region
      // Predicated region
      $region25: #{tpu_custom_call.1} parent=23 // pred_check
        %p128 = pneg %p29
      $region26: #{tpu_custom_call.1} parent=23 // pred_check_branch
        %130 = sbr.rel (%p128) target = $region28
      $region27: #{tpu_custom_call.1} parent=23 // pred_region
        %p131 = scmp.lt.s32.totalorder %s9, 1
        %s132 = scalar_select %p131, %s9, 1
        %s133 = smul.addr %s132, 32
        %s134 = smul.addr %s133, 8
        %s135 = scalar_lea.vmem %s0, %s134
      $region28: #{tpu_custom_call.1} parent=23 // pred_fallthru
        _
    $region24: #{tpu_custom_call.1} parent=5 // pred_fallthru
      _
    %p136 = scmp.le.s32.totalorder 1, %s9
    %p137 = scmp.lt.s32.totalorder %s9, 3
    %p138 = pnand %p136, %p137
    %p139 = pneg %p138
    // Predicated region
    $region29: #{tpu_custom_call.1} parent=5 // pred_check
      _
    $region30: #{tpu_custom_call.1} parent=5 // pred_check_branch
      %141 = sbr.rel (%p138) target = $region32
    $region31: #{tpu_custom_call.1} parent=5 // pred_region
      %s142 = ssub.s32 %s9, 1
      %p143 = scmp.lt.s32.totalorder %s14, 1
      %s144 = scalar_select %p143, %s14, 1
      %s145 = smul.addr %s144, 32
      %s146 = smul.addr %s145, 8
      %s147 = scalar_lea.vmem %s0, %s146
      %p148 = pneg %p35
      %p149 = pneg %p32
      %p150 = pneg %p56
      %p151 = pneg %p53
      %p152 = pneg %p77
      %p153 = pneg %p74
      %p154 = pneg %p103
      %p155 = pneg %p100
      %p156 = scmp.lt.s32.totalorder %s14, 1
      %s157 = scalar_select %p156, %s14, 1
      %s158 = smul.addr %s157, 32
      %s159 = smul.addr %s158, 8
      %s160 = scalar_lea.vmem %s3, %s159
      %p161 = scmp.lt.s32.totalorder %s14, 1
      %s162 = scalar_select %p161, %s14, 1
      %s163 = smul.addr %s162, 32
      %s164 = smul.addr %s163, 8
      %s165 = scalar_lea.vmem %s0, %s164
      %p166 = scmp.lt.s32.totalorder %s14, 1
      %s167 = scalar_select %p166, %s14, 1
      %s168 = smul.addr %s167, 32
      %s169 = smul.addr %s168, 8
      %s170 = scalar_lea.vmem %s3, %s169
      %171 = vst [vmem:[#allocation2] sm:$0xff] 0.0
      %172 = vst [vmem:[#allocation2 + $0x8] sm:$0xff] 0.0
      %173 = vst [vmem:[#allocation2 + $0x10] sm:$0x3] 0.0
      %s174 = scalar_lea.vmem [#allocation2], 408
      %175 = vst [vmem:[%s174] sm:$0xff] 0.0
      %176 = vst [vmem:[%s174 + $0x8] sm:$0xff] 0.0
      %177 = vst [vmem:[%s174 + $0x10] sm:$0x3] 0.0
      %s178 = scalar_lea.vmem [#allocation2], 24
      %179 = vst [vmem:[%s178] sm:$0x1] 0.0
      %180 = vst [vmem:[%s178 + $0x18] sm:$0x1] 0.0
      %181 = vst [vmem:[%s178 + $0x30] sm:$0x1] 0.0
      %182 = vst [vmem:[%s178 + $0x48] sm:$0x1] 0.0
      %183 = vst [vmem:[%s178 + $0x60] sm:$0x1] 0.0
      %184 = vst [vmem:[%s178 + $0x78] sm:$0x1] 0.0
      %185 = vst [vmem:[%s178 + $0x90] sm:$0x1] 0.0
      %186 = vst [vmem:[%s178 + $0xa8] sm:$0x1] 0.0
      %187 = vst [vmem:[%s178 + $0xc0] sm:$0x1] 0.0
      %188 = vst [vmem:[%s178 + $0xd8] sm:$0x1] 0.0
      %189 = vst [vmem:[%s178 + $0xf0] sm:$0x1] 0.0
      %190 = vst [vmem:[%s178 + $0x108] sm:$0x1] 0.0
      %191 = vst [vmem:[%s178 + $0x120] sm:$0x1] 0.0
      %192 = vst [vmem:[%s178 + $0x138] sm:$0x1] 0.0
      %193 = vst [vmem:[%s178 + $0x150] sm:$0x1] 0.0
      %194 = vst [vmem:[%s178 + $0x168] sm:$0x1] 0.0
      %195 = vst [vmem:[%s178 + $0x11] sm:$0x1] 0.0
      %196 = vst [vmem:[%s178 + $0x29] sm:$0x1] 0.0
      %197 = vst [vmem:[%s178 + $0x41] sm:$0x1] 0.0
      %198 = vst [vmem:[%s178 + $0x59] sm:$0x1] 0.0
      %199 = vst [vmem:[%s178 + $0x71] sm:$0x1] 0.0
      %200 = vst [vmem:[%s178 + $0x89] sm:$0x1] 0.0
      %201 = vst [vmem:[%s178 + $0xa1] sm:$0x1] 0.0
      %202 = vst [vmem:[%s178 + $0xb9] sm:$0x1] 0.0
      %203 = vst [vmem:[%s178 + $0xd1] sm:$0x1] 0.0
      %204 = vst [vmem:[%s178 + $0xe9] sm:$0x1] 0.0
      %205 = vst [vmem:[%s178 + $0x101] sm:$0x1] 0.0
      %206 = vst [vmem:[%s178 + $0x119] sm:$0x1] 0.0
      %207 = vst [vmem:[%s178 + $0x131] sm:$0x1] 0.0
      %208 = vst [vmem:[%s178 + $0x149] sm:$0x1] 0.0
      %209 = vst [vmem:[%s178 + $0x161] sm:$0x1] 0.0
      %210 = vst [vmem:[%s178 + $0x179] sm:$0x1] 0.0
      %v211 = vld [vmem:[%s165] sm:$0xff]
      %v212 = vld [vmem:[%s165 + $0x8] sm:$0xff]
      %v213 = vld [vmem:[%s165 + $0x10] sm:$0xff]
      %v214 = vld [vmem:[%s165 + $0x18] sm:$0xff]
      %v215 = vld [vmem:[%s165 + $0x20] sm:$0xff]
      %v216 = vld [vmem:[%s165 + $0x28] sm:$0xff]
      %v217 = vld [vmem:[%s165 + $0x30] sm:$0xff]
      %v218 = vld [vmem:[%s165 + $0x38] sm:$0xff]
      %v219 = vld [vmem:[%s165 + $0x40] sm:$0xff]
      %v220 = vld [vmem:[%s165 + $0x48] sm:$0xff]
      %v221 = vld [vmem:[%s165 + $0x50] sm:$0xff]
      %v222 = vld [vmem:[%s165 + $0x58] sm:$0xff]
      %v223 = vld [vmem:[%s165 + $0x60] sm:$0xff]
      %v224 = vld [vmem:[%s165 + $0x68] sm:$0xff]
      %v225 = vld [vmem:[%s165 + $0x70] sm:$0xff]
      %v226 = vld [vmem:[%s165 + $0x78] sm:$0xff]
      %v227 = vld [vmem:[%s165 + $0x80] sm:$0xff]
      %v228 = vld [vmem:[%s165 + $0x88] sm:$0xff]
      %v229 = vld [vmem:[%s165 + $0x90] sm:$0xff]
      %v230 = vld [vmem:[%s165 + $0x98] sm:$0xff]
      %v231 = vld [vmem:[%s165 + $0xa0] sm:$0xff]
      %v232 = vld [vmem:[%s165 + $0xa8] sm:$0xff]
      %v233 = vld [vmem:[%s165 + $0xb0] sm:$0xff]
      %v234 = vld [vmem:[%s165 + $0xb8] sm:$0xff]
      %v235 = vld [vmem:[%s165 + $0xc0] sm:$0xff]
      %v236 = vld [vmem:[%s165 + $0xc8] sm:$0xff]
      %v237 = vld [vmem:[%s165 + $0xd0] sm:$0xff]
      %v238 = vld [vmem:[%s165 + $0xd8] sm:$0xff]
      %v239 = vld [vmem:[%s165 + $0xe0] sm:$0xff]
      %v240 = vld [vmem:[%s165 + $0xe8] sm:$0xff]
      %v241 = vld [vmem:[%s165 + $0xf0] sm:$0xff]
      %v242 = vld [vmem:[%s165 + $0xf8] sm:$0xff]
      %243 = vst [vmem:[%s178 + $0x1] sm:$0xff] %v211
      %244 = vst [vmem:[%s178 + $0x9] sm:$0xff] %v212
      %245 = vst [vmem:[%s178 + $0x19] sm:$0xff] %v213
      %246 = vst [vmem:[%s178 + $0x21] sm:$0xff] %v214
      %247 = vst [vmem:[%s178 + $0x31] sm:$0xff] %v215
      %248 = vst [vmem:[%s178 + $0x39] sm:$0xff] %v216
      %249 = vst [vmem:[%s178 + $0x49] sm:$0xff] %v217
      %250 = vst [vmem:[%s178 + $0x51] sm:$0xff] %v218
      %251 = vst [vmem:[%s178 + $0x61] sm:$0xff] %v219
      %252 = vst [vmem:[%s178 + $0x69] sm:$0xff] %v220
      %253 = vst [vmem:[%s178 + $0x79] sm:$0xff] %v221
      %254 = vst [vmem:[%s178 + $0x81] sm:$0xff] %v222
      %255 = vst [vmem:[%s178 + $0x91] sm:$0xff] %v223
      %256 = vst [vmem:[%s178 + $0x99] sm:$0xff] %v224
      %257 = vst [vmem:[%s178 + $0xa9] sm:$0xff] %v225
      %258 = vst [vmem:[%s178 + $0xb1] sm:$0xff] %v226
      %259 = vst [vmem:[%s178 + $0xc1] sm:$0xff] %v227
      %260 = vst [vmem:[%s178 + $0xc9] sm:$0xff] %v228
      %261 = vst [vmem:[%s178 + $0xd9] sm:$0xff] %v229
      %262 = vst [vmem:[%s178 + $0xe1] sm:$0xff] %v230
      %263 = vst [vmem:[%s178 + $0xf1] sm:$0xff] %v231
      %264 = vst [vmem:[%s178 + $0xf9] sm:$0xff] %v232
      %265 = vst [vmem:[%s178 + $0x109] sm:$0xff] %v233
      %266 = vst [vmem:[%s178 + $0x111] sm:$0xff] %v234
      %267 = vst [vmem:[%s178 + $0x121] sm:$0xff] %v235
      %268 = vst [vmem:[%s178 + $0x129] sm:$0xff] %v236
      %269 = vst [vmem:[%s178 + $0x139] sm:$0xff] %v237
      %270 = vst [vmem:[%s178 + $0x141] sm:$0xff] %v238
      %271 = vst [vmem:[%s178 + $0x151] sm:$0xff] %v239
      %272 = vst [vmem:[%s178 + $0x159] sm:$0xff] %v240
      %273 = vst [vmem:[%s178 + $0x169] sm:$0xff] %v241
      %274 = vst [vmem:[%s178 + $0x171] sm:$0xff] %v242
      %v275 = vld [vmem:[#allocation2] sm:$0xff]
      %v276 = vld [vmem:[#allocation2 + $0x8] sm:$0xff]
      %v277 = vld [vmem:[#allocation2 + $0x18] sm:$0xff]
      %v278 = vld [vmem:[#allocation2 + $0x20] sm:$0xff]
      %v279 = vld [vmem:[#allocation2 + $0x30] sm:$0xff]
      %v280 = vld [vmem:[#allocation2 + $0x38] sm:$0xff]
      %v281 = vld [vmem:[#allocation2 + $0x48] sm:$0xff]
      %v282 = vld [vmem:[#allocation2 + $0x50] sm:$0xff]
      %v283 = vld [vmem:[#allocation2 + $0x60] sm:$0xff]
      %v284 = vld [vmem:[#allocation2 + $0x68] sm:$0xff]
      %v285 = vld [vmem:[#allocation2 + $0x78] sm:$0xff]
      %v286 = vld [vmem:[#allocation2 + $0x80] sm:$0xff]
      %v287 = vld [vmem:[#allocation2 + $0x90] sm:$0xff]
      %v288 = vld [vmem:[#allocation2 + $0x98] sm:$0xff]
      %v289 = vld [vmem:[#allocation2 + $0xa8] sm:$0xff]
      %v290 = vld [vmem:[#allocation2 + $0xb0] sm:$0xff]
      %v291 = vld [vmem:[#allocation2 + $0xc0] sm:$0xff]
      %v292 = vld [vmem:[#allocation2 + $0xc8] sm:$0xff]
      %v293 = vld [vmem:[#allocation2 + $0xd8] sm:$0xff]
      %v294 = vld [vmem:[#allocation2 + $0xe0] sm:$0xff]
      %v295 = vld [vmem:[#allocation2 + $0xf0] sm:$0xff]
      %v296 = vld [vmem:[#allocation2 + $0xf8] sm:$0xff]
      %v297 = vld [vmem:[#allocation2 + $0x108] sm:$0xff]
      %v298 = vld [vmem:[#allocation2 + $0x110] sm:$0xff]
      %v299 = vld [vmem:[#allocation2 + $0x120] sm:$0xff]
      %v300 = vld [vmem:[#allocation2 + $0x128] sm:$0xff]
      %v301 = vld [vmem:[#allocation2 + $0x138] sm:$0xff]
      %v302 = vld [vmem:[#allocation2 + $0x140] sm:$0xff]
      %v303 = vld [vmem:[#allocation2 + $0x150] sm:$0xff]
      %v304 = vld [vmem:[#allocation2 + $0x158] sm:$0xff]
      %v305 = vld [vmem:[#allocation2 + $0x168] sm:$0xff]
      %v306 = vld [vmem:[#allocation2 + $0x170] sm:$0xff]
      %307 = vst [vmem:[#allocation3] sm:$0xff] %v275
      %308 = vst [vmem:[#allocation3 + $0x48] sm:$0xff] %v276
      %309 = vst [vmem:[#allocation3 + $0x90] sm:$0xff] %v277
      %310 = vst [vmem:[#allocation3 + $0xd8] sm:$0xff] %v278
      %311 = vst [vmem:[#allocation3 + $0x120] sm:$0xff] %v279
      %312 = vst [vmem:[#allocation3 + $0x168] sm:$0xff] %v280
      %313 = vst [vmem:[#allocation3 + $0x1b0] sm:$0xff] %v281
      %314 = vst [vmem:[#allocation3 + $0x1f8] sm:$0xff] %v282
      %315 = vst [vmem:[#allocation3 + $0x240] sm:$0xff] %v283
      %316 = vst [vmem:[#allocation3 + $0x288] sm:$0xff] %v284
      %317 = vst [vmem:[#allocation3 + $0x2d0] sm:$0xff] %v285
      %318 = vst [vmem:[#allocation3 + $0x318] sm:$0xff] %v286
      %319 = vst [vmem:[#allocation3 + $0x360] sm:$0xff] %v287
      %320 = vst [vmem:[#allocation3 + $0x3a8] sm:$0xff] %v288
      %321 = vst [vmem:[#allocation3 + $0x3f0] sm:$0xff] %v289
      %322 = vst [vmem:[#allocation3 + $0x438] sm:$0xff] %v290
      %323 = vst [vmem:[#allocation3 + $0x480] sm:$0xff] %v291
      %324 = vst [vmem:[#allocation3 + $0x4c8] sm:$0xff] %v292
      %325 = vst [vmem:[#allocation3 + $0x510] sm:$0xff] %v293
      %326 = vst [vmem:[#allocation3 + $0x558] sm:$0xff] %v294
      %327 = vst [vmem:[#allocation3 + $0x5a0] sm:$0xff] %v295
      %328 = vst [vmem:[#allocation3 + $0x5e8] sm:$0xff] %v296
      %329 = vst [vmem:[#allocation3 + $0x630] sm:$0xff] %v297
      %330 = vst [vmem:[#allocation3 + $0x678] sm:$0xff] %v298
      %331 = vst [vmem:[#allocation3 + $0x6c0] sm:$0xff] %v299
      %332 = vst [vmem:[#allocation3 + $0x708] sm:$0xff] %v300
      %333 = vst [vmem:[#allocation3 + $0x750] sm:$0xff] %v301
      %334 = vst [vmem:[#allocation3 + $0x798] sm:$0xff] %v302
      %335 = vst [vmem:[#allocation3 + $0x7e0] sm:$0xff] %v303
      %336 = vst [vmem:[#allocation3 + $0x828] sm:$0xff] %v304
      %337 = vst [vmem:[#allocation3 + $0x870] sm:$0xff] %v305
      %338 = vst [vmem:[#allocation3 + $0x8b8] sm:$0xff] %v306
      %v339 = vld [vmem:[#allocation2 + $0x1] sm:$0xff]
      %v340 = vld [vmem:[#allocation2 + $0x9] sm:$0xff]
      %v341 = vld [vmem:[#allocation2 + $0x19] sm:$0xff]
      %v342 = vld [vmem:[#allocation2 + $0x21] sm:$0xff]
      %v343 = vld [vmem:[#allocation2 + $0x31] sm:$0xff]
      %v344 = vld [vmem:[#allocation2 + $0x39] sm:$0xff]
      %v345 = vld [vmem:[#allocation2 + $0x49] sm:$0xff]
      %v346 = vld [vmem:[#allocation2 + $0x51] sm:$0xff]
      %v347 = vld [vmem:[#allocation2 + $0x61] sm:$0xff]
      %v348 = vld [vmem:[#allocation2 + $0x69] sm:$0xff]
      %v349 = vld [vmem:[#allocation2 + $0x79] sm:$0xff]
      %v350 = vld [vmem:[#allocation2 + $0x81] sm:$0xff]
      %v351 = vld [vmem:[#allocation2 + $0x91] sm:$0xff]
      %v352 = vld [vmem:[#allocation2 + $0x99] sm:$0xff]
      %v353 = vld [vmem:[#allocation2 + $0xa9] sm:$0xff]
      %v354 = vld [vmem:[#allocation2 + $0xb1] sm:$0xff]
      %v355 = vld [vmem:[#allocation2 + $0xc1] sm:$0xff]
      %v356 = vld [vmem:[#allocation2 + $0xc9] sm:$0xff]
      %v357 = vld [vmem:[#allocation2 + $0xd9] sm:$0xff]
      %v358 = vld [vmem:[#allocation2 + $0xe1] sm:$0xff]
      %v359 = vld [vmem:[#allocation2 + $0xf1] sm:$0xff]
      %v360 = vld [vmem:[#allocation2 + $0xf9] sm:$0xff]
      %v361 = vld [vmem:[#allocation2 + $0x109] sm:$0xff]
      %v362 = vld [vmem:[#allocation2 + $0x111] sm:$0xff]
      %v363 = vld [vmem:[#allocation2 + $0x121] sm:$0xff]
      %v364 = vld [vmem:[#allocation2 + $0x129] sm:$0xff]
      %v365 = vld [vmem:[#allocation2 + $0x139] sm:$0xff]
      %v366 = vld [vmem:[#allocation2 + $0x141] sm:$0xff]
      %v367 = vld [vmem:[#allocation2 + $0x151] sm:$0xff]
      %v368 = vld [vmem:[#allocation2 + $0x159] sm:$0xff]
      %v369 = vld [vmem:[#allocation2 + $0x169] sm:$0xff]
      %v370 = vld [vmem:[#allocation2 + $0x171] sm:$0xff]
      %371 = vst [vmem:[#allocation3 + $0x8] sm:$0xff] %v339
      %372 = vst [vmem:[#allocation3 + $0x50] sm:$0xff] %v340
      %373 = vst [vmem:[#allocation3 + $0x98] sm:$0xff] %v341
      %374 = vst [vmem:[#allocation3 + $0xe0] sm:$0xff] %v342
      %375 = vst [vmem:[#allocation3 + $0x128] sm:$0xff] %v343
      %376 = vst [vmem:[#allocation3 + $0x170] sm:$0xff] %v344
      %377 = vst [vmem:[#allocation3 + $0x1b8] sm:$0xff] %v345
      %378 = vst [vmem:[#allocation3 + $0x200] sm:$0xff] %v346
      %379 = vst [vmem:[#allocation3 + $0x248] sm:$0xff] %v347
      %380 = vst [vmem:[#allocation3 + $0x290] sm:$0xff] %v348
      %381 = vst [vmem:[#allocation3 + $0x2d8] sm:$0xff] %v349
      %382 = vst [vmem:[#allocation3 + $0x320] sm:$0xff] %v350
      %383 = vst [vmem:[#allocation3 + $0x368] sm:$0xff] %v351
      %384 = vst [vmem:[#allocation3 + $0x3b0] sm:$0xff] %v352
      %385 = vst [vmem:[#allocation3 + $0x3f8] sm:$0xff] %v353
      %386 = vst [vmem:[#allocation3 + $0x440] sm:$0xff] %v354
      %387 = vst [vmem:[#allocation3 + $0x488] sm:$0xff] %v355
      %388 = vst [vmem:[#allocation3 + $0x4d0] sm:$0xff] %v356
      %389 = vst [vmem:[#allocation3 + $0x518] sm:$0xff] %v357
      %390 = vst [vmem:[#allocation3 + $0x560] sm:$0xff] %v358
      %391 = vst [vmem:[#allocation3 + $0x5a8] sm:$0xff] %v359
      %392 = vst [vmem:[#allocation3 + $0x5f0] sm:$0xff] %v360
      %393 = vst [vmem:[#allocation3 + $0x638] sm:$0xff] %v361
      %394 = vst [vmem:[#allocation3 + $0x680] sm:$0xff] %v362
      %395 = vst [vmem:[#allocation3 + $0x6c8] sm:$0xff] %v363
      %396 = vst [vmem:[#allocation3 + $0x710] sm:$0xff] %v364
      %397 = vst [vmem:[#allocation3 + $0x758] sm:$0xff] %v365
      %398 = vst [vmem:[#allocation3 + $0x7a0] sm:$0xff] %v366
      %399 = vst [vmem:[#allocation3 + $0x7e8] sm:$0xff] %v367
      %400 = vst [vmem:[#allocation3 + $0x830] sm:$0xff] %v368
      %401 = vst [vmem:[#allocation3 + $0x878] sm:$0xff] %v369
      %402 = vst [vmem:[#allocation3 + $0x8c0] sm:$0xff] %v370
      %v403 = vld [vmem:[#allocation2 + $0x2] sm:$0xff]
      %v404 = vld [vmem:[#allocation2 + $0xa] sm:$0xff]
      %v405 = vld [vmem:[#allocation2 + $0x1a] sm:$0xff]
      %v406 = vld [vmem:[#allocation2 + $0x22] sm:$0xff]
      %v407 = vld [vmem:[#allocation2 + $0x32] sm:$0xff]
      %v408 = vld [vmem:[#allocation2 + $0x3a] sm:$0xff]
      %v409 = vld [vmem:[#allocation2 + $0x4a] sm:$0xff]
      %v410 = vld [vmem:[#allocation2 + $0x52] sm:$0xff]
      %v411 = vld [vmem:[#allocation2 + $0x62] sm:$0xff]
      %v412 = vld [vmem:[#allocation2 + $0x6a] sm:$0xff]
      %v413 = vld [vmem:[#allocation2 + $0x7a] sm:$0xff]
      %v414 = vld [vmem:[#allocation2 + $0x82] sm:$0xff]
      %v415 = vld [vmem:[#allocation2 + $0x92] sm:$0xff]
      %v416 = vld [vmem:[#allocation2 + $0x9a] sm:$0xff]
      %v417 = vld [vmem:[#allocation2 + $0xaa] sm:$0xff]
      %v418 = vld [vmem:[#allocation2 + $0xb2] sm:$0xff]
      %v419 = vld [vmem:[#allocation2 + $0xc2] sm:$0xff]
      %v420 = vld [vmem:[#allocation2 + $0xca] sm:$0xff]
      %v421 = vld [vmem:[#allocation2 + $0xda] sm:$0xff]
      %v422 = vld [vmem:[#allocation2 + $0xe2] sm:$0xff]
      %v423 = vld [vmem:[#allocation2 + $0xf2] sm:$0xff]
      %v424 = vld [vmem:[#allocation2 + $0xfa] sm:$0xff]
      %v425 = vld [vmem:[#allocation2 + $0x10a] sm:$0xff]
      %v426 = vld [vmem:[#allocation2 + $0x112] sm:$0xff]
      %v427 = vld [vmem:[#allocation2 + $0x122] sm:$0xff]
      %v428 = vld [vmem:[#allocation2 + $0x12a] sm:$0xff]
      %v429 = vld [vmem:[#allocation2 + $0x13a] sm:$0xff]
      %v430 = vld [vmem:[#allocation2 + $0x142] sm:$0xff]
      %v431 = vld [vmem:[#allocation2 + $0x152] sm:$0xff]
      %v432 = vld [vmem:[#allocation2 + $0x15a] sm:$0xff]
      %v433 = vld [vmem:[#allocation2 + $0x16a] sm:$0xff]
      %v434 = vld [vmem:[#allocation2 + $0x172] sm:$0xff]
      %435 = vst [vmem:[#allocation3 + $0x10] sm:$0xff] %v403
      %436 = vst [vmem:[#allocation3 + $0x58] sm:$0xff] %v404
      %437 = vst [vmem:[#allocation3 + $0xa0] sm:$0xff] %v405
      %438 = vst [vmem:[#allocation3 + $0xe8] sm:$0xff] %v406
      %439 = vst [vmem:[#allocation3 + $0x130] sm:$0xff] %v407
      %440 = vst [vmem:[#allocation3 + $0x178] sm:$0xff] %v408
      %441 = vst [vmem:[#allocation3 + $0x1c0] sm:$0xff] %v409
      %442 = vst [vmem:[#allocation3 + $0x208] sm:$0xff] %v410
      %443 = vst [vmem:[#allocation3 + $0x250] sm:$0xff] %v411
      %444 = vst [vmem:[#allocation3 + $0x298] sm:$0xff] %v412
      %445 = vst [vmem:[#allocation3 + $0x2e0] sm:$0xff] %v413
      %446 = vst [vmem:[#allocation3 + $0x328] sm:$0xff] %v414
      %447 = vst [vmem:[#allocation3 + $0x370] sm:$0xff] %v415
      %448 = vst [vmem:[#allocation3 + $0x3b8] sm:$0xff] %v416
      %449 = vst [vmem:[#allocation3 + $0x400] sm:$0xff] %v417
      %450 = vst [vmem:[#allocation3 + $0x448] sm:$0xff] %v418
      %451 = vst [vmem:[#allocation3 + $0x490] sm:$0xff] %v419
      %452 = vst [vmem:[#allocation3 + $0x4d8] sm:$0xff] %v420
      %453 = vst [vmem:[#allocation3 + $0x520] sm:$0xff] %v421
      %454 = vst [vmem:[#allocation3 + $0x568] sm:$0xff] %v422
      %455 = vst [vmem:[#allocation3 + $0x5b0] sm:$0xff] %v423
      %456 = vst [vmem:[#allocation3 + $0x5f8] sm:$0xff] %v424
      %457 = vst [vmem:[#allocation3 + $0x640] sm:$0xff] %v425
      %458 = vst [vmem:[#allocation3 + $0x688] sm:$0xff] %v426
      %459 = vst [vmem:[#allocation3 + $0x6d0] sm:$0xff] %v427
      %460 = vst [vmem:[#allocation3 + $0x718] sm:$0xff] %v428
      %461 = vst [vmem:[#allocation3 + $0x760] sm:$0xff] %v429
      %462 = vst [vmem:[#allocation3 + $0x7a8] sm:$0xff] %v430
      %463 = vst [vmem:[#allocation3 + $0x7f0] sm:$0xff] %v431
      %464 = vst [vmem:[#allocation3 + $0x838] sm:$0xff] %v432
      %465 = vst [vmem:[#allocation3 + $0x880] sm:$0xff] %v433
      %466 = vst [vmem:[#allocation3 + $0x8c8] sm:$0xff] %v434
      %v467 = vld [vmem:[%s178] sm:$0xff]
      %v468 = vld [vmem:[%s178 + $0x8] sm:$0xff]
      %v469 = vld [vmem:[%s178 + $0x18] sm:$0xff]
      %v470 = vld [vmem:[%s178 + $0x20] sm:$0xff]
      %v471 = vld [vmem:[%s178 + $0x30] sm:$0xff]
      %v472 = vld [vmem:[%s178 + $0x38] sm:$0xff]
      %v473 = vld [vmem:[%s178 + $0x48] sm:$0xff]
      %v474 = vld [vmem:[%s178 + $0x50] sm:$0xff]
      %v475 = vld [vmem:[%s178 + $0x60] sm:$0xff]
      %v476 = vld [vmem:[%s178 + $0x68] sm:$0xff]
      %v477 = vld [vmem:[%s178 + $0x78] sm:$0xff]
      %v478 = vld [vmem:[%s178 + $0x80] sm:$0xff]
      %v479 = vld [vmem:[%s178 + $0x90] sm:$0xff]
      %v480 = vld [vmem:[%s178 + $0x98] sm:$0xff]
      %v481 = vld [vmem:[%s178 + $0xa8] sm:$0xff]
      %v482 = vld [vmem:[%s178 + $0xb0] sm:$0xff]
      %v483 = vld [vmem:[%s178 + $0xc0] sm:$0xff]
      %v484 = vld [vmem:[%s178 + $0xc8] sm:$0xff]
      %v485 = vld [vmem:[%s178 + $0xd8] sm:$0xff]
      %v486 = vld [vmem:[%s178 + $0xe0] sm:$0xff]
      %v487 = vld [vmem:[%s178 + $0xf0] sm:$0xff]
      %v488 = vld [vmem:[%s178 + $0xf8] sm:$0xff]
      %v489 = vld [vmem:[%s178 + $0x108] sm:$0xff]
      %v490 = vld [vmem:[%s178 + $0x110] sm:$0xff]
      %v491 = vld [vmem:[%s178 + $0x120] sm:$0xff]
      %v492 = vld [vmem:[%s178 + $0x128] sm:$0xff]
      %v493 = vld [vmem:[%s178 + $0x138] sm:$0xff]
      %v494 = vld [vmem:[%s178 + $0x140] sm:$0xff]
      %v495 = vld [vmem:[%s178 + $0x150] sm:$0xff]
      %v496 = vld [vmem:[%s178 + $0x158] sm:$0xff]
      %v497 = vld [vmem:[%s178 + $0x168] sm:$0xff]
      %v498 = vld [vmem:[%s178 + $0x170] sm:$0xff]
      %499 = vst [vmem:[#allocation3 + $0x18] sm:$0xff] %v467
      %500 = vst [vmem:[#allocation3 + $0x60] sm:$0xff] %v468
      %501 = vst [vmem:[#allocation3 + $0xa8] sm:$0xff] %v469
      %502 = vst [vmem:[#allocation3 + $0xf0] sm:$0xff] %v470
      %503 = vst [vmem:[#allocation3 + $0x138] sm:$0xff] %v471
      %504 = vst [vmem:[#allocation3 + $0x180] sm:$0xff] %v472
      %505 = vst [vmem:[#allocation3 + $0x1c8] sm:$0xff] %v473
      %506 = vst [vmem:[#allocation3 + $0x210] sm:$0xff] %v474
      %507 = vst [vmem:[#allocation3 + $0x258] sm:$0xff] %v475
      %508 = vst [vmem:[#allocation3 + $0x2a0] sm:$0xff] %v476
      %509 = vst [vmem:[#allocation3 + $0x2e8] sm:$0xff] %v477
      %510 = vst [vmem:[#allocation3 + $0x330] sm:$0xff] %v478
      %511 = vst [vmem:[#allocation3 + $0x378] sm:$0xff] %v479
      %512 = vst [vmem:[#allocation3 + $0x3c0] sm:$0xff] %v480
      %513 = vst [vmem:[#allocation3 + $0x408] sm:$0xff] %v481
      %514 = vst [vmem:[#allocation3 + $0x450] sm:$0xff] %v482
      %515 = vst [vmem:[#allocation3 + $0x498] sm:$0xff] %v483
      %516 = vst [vmem:[#allocation3 + $0x4e0] sm:$0xff] %v484
      %517 = vst [vmem:[#allocation3 + $0x528] sm:$0xff] %v485
      %518 = vst [vmem:[#allocation3 + $0x570] sm:$0xff] %v486
      %519 = vst [vmem:[#allocation3 + $0x5b8] sm:$0xff] %v487
      %520 = vst [vmem:[#allocation3 + $0x600] sm:$0xff] %v488
      %521 = vst [vmem:[#allocation3 + $0x648] sm:$0xff] %v489
      %522 = vst [vmem:[#allocation3 + $0x690] sm:$0xff] %v490
      %523 = vst [vmem:[#allocation3 + $0x6d8] sm:$0xff] %v491
      %524 = vst [vmem:[#allocation3 + $0x720] sm:$0xff] %v492
      %525 = vst [vmem:[#allocation3 + $0x768] sm:$0xff] %v493
      %526 = vst [vmem:[#allocation3 + $0x7b0] sm:$0xff] %v494
      %527 = vst [vmem:[#allocation3 + $0x7f8] sm:$0xff] %v495
      %528 = vst [vmem:[#allocation3 + $0x840] sm:$0xff] %v496
      %529 = vst [vmem:[#allocation3 + $0x888] sm:$0xff] %v497
      %530 = vst [vmem:[#allocation3 + $0x8d0] sm:$0xff] %v498
      %v531 = vld [vmem:[%s178 + $0x1] sm:$0xff]
      %v532 = vld [vmem:[%s178 + $0x9] sm:$0xff]
      %v533 = vld [vmem:[%s178 + $0x19] sm:$0xff]
      %v534 = vld [vmem:[%s178 + $0x21] sm:$0xff]
      %v535 = vld [vmem:[%s178 + $0x31] sm:$0xff]
      %v536 = vld [vmem:[%s178 + $0x39] sm:$0xff]
      %v537 = vld [vmem:[%s178 + $0x49] sm:$0xff]
      %v538 = vld [vmem:[%s178 + $0x51] sm:$0xff]
      %v539 = vld [vmem:[%s178 + $0x61] sm:$0xff]
      %v540 = vld [vmem:[%s178 + $0x69] sm:$0xff]
      %v541 = vld [vmem:[%s178 + $0x79] sm:$0xff]
      %v542 = vld [vmem:[%s178 + $0x81] sm:$0xff]
      %v543 = vld [vmem:[%s178 + $0x91] sm:$0xff]
      %v544 = vld [vmem:[%s178 + $0x99] sm:$0xff]
      %v545 = vld [vmem:[%s178 + $0xa9] sm:$0xff]
      %v546 = vld [vmem:[%s178 + $0xb1] sm:$0xff]
      %v547 = vld [vmem:[%s178 + $0xc1] sm:$0xff]
      %v548 = vld [vmem:[%s178 + $0xc9] sm:$0xff]
      %v549 = vld [vmem:[%s178 + $0xd9] sm:$0xff]
      %v550 = vld [vmem:[%s178 + $0xe1] sm:$0xff]
      %v551 = vld [vmem:[%s178 + $0xf1] sm:$0xff]
      %v552 = vld [vmem:[%s178 + $0xf9] sm:$0xff]
      %v553 = vld [vmem:[%s178 + $0x109] sm:$0xff]
      %v554 = vld [vmem:[%s178 + $0x111] sm:$0xff]
      %v555 = vld [vmem:[%s178 + $0x121] sm:$0xff]
      %v556 = vld [vmem:[%s178 + $0x129] sm:$0xff]
      %v557 = vld [vmem:[%s178 + $0x139] sm:$0xff]
      %v558 = vld [vmem:[%s178 + $0x141] sm:$0xff]
      %v559 = vld [vmem:[%s178 + $0x151] sm:$0xff]
      %v560 = vld [vmem:[%s178 + $0x159] sm:$0xff]
      %v561 = vld [vmem:[%s178 + $0x169] sm:$0xff]
      %v562 = vld [vmem:[%s178 + $0x171] sm:$0xff]
      %563 = vst [vmem:[#allocation3 + $0x20] sm:$0xff] %v531
      %564 = vst [vmem:[#allocation3 + $0x68] sm:$0xff] %v532
      %565 = vst [vmem:[#allocation3 + $0xb0] sm:$0xff] %v533
      %566 = vst [vmem:[#allocation3 + $0xf8] sm:$0xff] %v534
      %567 = vst [vmem:[#allocation3 + $0x140] sm:$0xff] %v535
      %568 = vst [vmem:[#allocation3 + $0x188] sm:$0xff] %v536
      %569 = vst [vmem:[#allocation3 + $0x1d0] sm:$0xff] %v537
      %570 = vst [vmem:[#allocation3 + $0x218] sm:$0xff] %v538
      %571 = vst [vmem:[#allocation3 + $0x260] sm:$0xff] %v539
      %572 = vst [vmem:[#allocation3 + $0x2a8] sm:$0xff] %v540
      %573 = vst [vmem:[#allocation3 + $0x2f0] sm:$0xff] %v541
      %574 = vst [vmem:[#allocation3 + $0x338] sm:$0xff] %v542
      %575 = vst [vmem:[#allocation3 + $0x380] sm:$0xff] %v543
      %576 = vst [vmem:[#allocation3 + $0x3c8] sm:$0xff] %v544
      %577 = vst [vmem:[#allocation3 + $0x410] sm:$0xff] %v545
      %578 = vst [vmem:[#allocation3 + $0x458] sm:$0xff] %v546
      %579 = vst [vmem:[#allocation3 + $0x4a0] sm:$0xff] %v547
      %580 = vst [vmem:[#allocation3 + $0x4e8] sm:$0xff] %v548
      %581 = vst [vmem:[#allocation3 + $0x530] sm:$0xff] %v549
      %582 = vst [vmem:[#allocation3 + $0x578] sm:$0xff] %v550
      %583 = vst [vmem:[#allocation3 + $0x5c0] sm:$0xff] %v551
      %584 = vst [vmem:[#allocation3 + $0x608] sm:$0xff] %v552
      %585 = vst [vmem:[#allocation3 + $0x650] sm:$0xff] %v553
      %586 = vst [vmem:[#allocation3 + $0x698] sm:$0xff] %v554
      %587 = vst [vmem:[#allocation3 + $0x6e0] sm:$0xff] %v555
      %588 = vst [vmem:[#allocation3 + $0x728] sm:$0xff] %v556
      %589 = vst [vmem:[#allocation3 + $0x770] sm:$0xff] %v557
      %590 = vst [vmem:[#allocation3 + $0x7b8] sm:$0xff] %v558
      %591 = vst [vmem:[#allocation3 + $0x800] sm:$0xff] %v559
      %592 = vst [vmem:[#allocation3 + $0x848] sm:$0xff] %v560
      %593 = vst [vmem:[#allocation3 + $0x890] sm:$0xff] %v561
      %594 = vst [vmem:[#allocation3 + $0x8d8] sm:$0xff] %v562
      %v595 = vld [vmem:[%s178 + $0x2] sm:$0xff]
      %v596 = vld [vmem:[%s178 + $0xa] sm:$0xff]
      %v597 = vld [vmem:[%s178 + $0x1a] sm:$0xff]
      %v598 = vld [vmem:[%s178 + $0x22] sm:$0xff]
      %v599 = vld [vmem:[%s178 + $0x32] sm:$0xff]
      %v600 = vld [vmem:[%s178 + $0x3a] sm:$0xff]
      %v601 = vld [vmem:[%s178 + $0x4a] sm:$0xff]
      %v602 = vld [vmem:[%s178 + $0x52] sm:$0xff]
      %v603 = vld [vmem:[%s178 + $0x62] sm:$0xff]
      %v604 = vld [vmem:[%s178 + $0x6a] sm:$0xff]
      %v605 = vld [vmem:[%s178 + $0x7a] sm:$0xff]
      %v606 = vld [vmem:[%s178 + $0x82] sm:$0xff]
      %v607 = vld [vmem:[%s178 + $0x92] sm:$0xff]
      %v608 = vld [vmem:[%s178 + $0x9a] sm:$0xff]
      %v609 = vld [vmem:[%s178 + $0xaa] sm:$0xff]
      %v610 = vld [vmem:[%s178 + $0xb2] sm:$0xff]
      %v611 = vld [vmem:[%s178 + $0xc2] sm:$0xff]
      %v612 = vld [vmem:[%s178 + $0xca] sm:$0xff]
      %v613 = vld [vmem:[%s178 + $0xda] sm:$0xff]
      %v614 = vld [vmem:[%s178 + $0xe2] sm:$0xff]
      %v615 = vld [vmem:[%s178 + $0xf2] sm:$0xff]
      %v616 = vld [vmem:[%s178 + $0xfa] sm:$0xff]
      %v617 = vld [vmem:[%s178 + $0x10a] sm:$0xff]
      %v618 = vld [vmem:[%s178 + $0x112] sm:$0xff]
      %v619 = vld [vmem:[%s178 + $0x122] sm:$0xff]
      %v620 = vld [vmem:[%s178 + $0x12a] sm:$0xff]
      %v621 = vld [vmem:[%s178 + $0x13a] sm:$0xff]
      %v622 = vld [vmem:[%s178 + $0x142] sm:$0xff]
      %v623 = vld [vmem:[%s178 + $0x152] sm:$0xff]
      %v624 = vld [vmem:[%s178 + $0x15a] sm:$0xff]
      %v625 = vld [vmem:[%s178 + $0x16a] sm:$0xff]
      %v626 = vld [vmem:[%s178 + $0x172] sm:$0xff]
      %627 = vst [vmem:[#allocation3 + $0x28] sm:$0xff] %v595
      %628 = vst [vmem:[#allocation3 + $0x70] sm:$0xff] %v596
      %629 = vst [vmem:[#allocation3 + $0xb8] sm:$0xff] %v597
      %630 = vst [vmem:[#allocation3 + $0x100] sm:$0xff] %v598
      %631 = vst [vmem:[#allocation3 + $0x148] sm:$0xff] %v599
      %632 = vst [vmem:[#allocation3 + $0x190] sm:$0xff] %v600
      %633 = vst [vmem:[#allocation3 + $0x1d8] sm:$0xff] %v601
      %634 = vst [vmem:[#allocation3 + $0x220] sm:$0xff] %v602
      %635 = vst [vmem:[#allocation3 + $0x268] sm:$0xff] %v603
      %636 = vst [vmem:[#allocation3 + $0x2b0] sm:$0xff] %v604
      %637 = vst [vmem:[#allocation3 + $0x2f8] sm:$0xff] %v605
      %638 = vst [vmem:[#allocation3 + $0x340] sm:$0xff] %v606
      %639 = vst [vmem:[#allocation3 + $0x388] sm:$0xff] %v607
      %640 = vst [vmem:[#allocation3 + $0x3d0] sm:$0xff] %v608
      %641 = vst [vmem:[#allocation3 + $0x418] sm:$0xff] %v609
      %642 = vst [vmem:[#allocation3 + $0x460] sm:$0xff] %v610
      %643 = vst [vmem:[#allocation3 + $0x4a8] sm:$0xff] %v611
      %644 = vst [vmem:[#allocation3 + $0x4f0] sm:$0xff] %v612
      %645 = vst [vmem:[#allocation3 + $0x538] sm:$0xff] %v613
      %646 = vst [vmem:[#allocation3 + $0x580] sm:$0xff] %v614
      %647 = vst [vmem:[#allocation3 + $0x5c8] sm:$0xff] %v615
      %648 = vst [vmem:[#allocation3 + $0x610] sm:$0xff] %v616
      %649 = vst [vmem:[#allocation3 + $0x658] sm:$0xff] %v617
      %650 = vst [vmem:[#allocation3 + $0x6a0] sm:$0xff] %v618
      %651 = vst [vmem:[#allocation3 + $0x6e8] sm:$0xff] %v619
      %652 = vst [vmem:[#allocation3 + $0x730] sm:$0xff] %v620
      %653 = vst [vmem:[#allocation3 + $0x778] sm:$0xff] %v621
      %654 = vst [vmem:[#allocation3 + $0x7c0] sm:$0xff] %v622
      %655 = vst [vmem:[#allocation3 + $0x808] sm:$0xff] %v623
      %656 = vst [vmem:[#allocation3 + $0x850] sm:$0xff] %v624
      %657 = vst [vmem:[#allocation3 + $0x898] sm:$0xff] %v625
      %658 = vst [vmem:[#allocation3 + $0x8e0] sm:$0xff] %v626
      %s659 = scalar_lea.vmem [#allocation2], 48
      %v660 = vld [vmem:[%s659] sm:$0xff]
      %v661 = vld [vmem:[%s659 + $0x8] sm:$0xff]
      %v662 = vld [vmem:[%s659 + $0x18] sm:$0xff]
      %v663 = vld [vmem:[%s659 + $0x20] sm:$0xff]
      %v664 = vld [vmem:[%s659 + $0x30] sm:$0xff]
      %v665 = vld [vmem:[%s659 + $0x38] sm:$0xff]
      %v666 = vld [vmem:[%s659 + $0x48] sm:$0xff]
      %v667 = vld [vmem:[%s659 + $0x50] sm:$0xff]
      %v668 = vld [vmem:[%s659 + $0x60] sm:$0xff]
      %v669 = vld [vmem:[%s659 + $0x68] sm:$0xff]
      %v670 = vld [vmem:[%s659 + $0x78] sm:$0xff]
      %v671 = vld [vmem:[%s659 + $0x80] sm:$0xff]
      %v672 = vld [vmem:[%s659 + $0x90] sm:$0xff]
      %v673 = vld [vmem:[%s659 + $0x98] sm:$0xff]
      %v674 = vld [vmem:[%s659 + $0xa8] sm:$0xff]
      %v675 = vld [vmem:[%s659 + $0xb0] sm:$0xff]
      %v676 = vld [vmem:[%s659 + $0xc0] sm:$0xff]
      %v677 = vld [vmem:[%s659 + $0xc8] sm:$0xff]
      %v678 = vld [vmem:[%s659 + $0xd8] sm:$0xff]
      %v679 = vld [vmem:[%s659 + $0xe0] sm:$0xff]
      %v680 = vld [vmem:[%s659 + $0xf0] sm:$0xff]
      %v681 = vld [vmem:[%s659 + $0xf8] sm:$0xff]
      %v682 = vld [vmem:[%s659 + $0x108] sm:$0xff]
      %v683 = vld [vmem:[%s659 + $0x110] sm:$0xff]
      %v684 = vld [vmem:[%s659 + $0x120] sm:$0xff]
      %v685 = vld [vmem:[%s659 + $0x128] sm:$0xff]
      %v686 = vld [vmem:[%s659 + $0x138] sm:$0xff]
      %v687 = vld [vmem:[%s659 + $0x140] sm:$0xff]
      %v688 = vld [vmem:[%s659 + $0x150] sm:$0xff]
      %v689 = vld [vmem:[%s659 + $0x158] sm:$0xff]
      %v690 = vld [vmem:[%s659 + $0x168] sm:$0xff]
      %v691 = vld [vmem:[%s659 + $0x170] sm:$0xff]
      %692 = vst [vmem:[#allocation3 + $0x30] sm:$0xff] %v660
      %693 = vst [vmem:[#allocation3 + $0x78] sm:$0xff] %v661
      %694 = vst [vmem:[#allocation3 + $0xc0] sm:$0xff] %v662
      %695 = vst [vmem:[#allocation3 + $0x108] sm:$0xff] %v663
      %696 = vst [vmem:[#allocation3 + $0x150] sm:$0xff] %v664
      %697 = vst [vmem:[#allocation3 + $0x198] sm:$0xff] %v665
      %698 = vst [vmem:[#allocation3 + $0x1e0] sm:$0xff] %v666
      %699 = vst [vmem:[#allocation3 + $0x228] sm:$0xff] %v667
      %700 = vst [vmem:[#allocation3 + $0x270] sm:$0xff] %v668
      %701 = vst [vmem:[#allocation3 + $0x2b8] sm:$0xff] %v669
      %702 = vst [vmem:[#allocation3 + $0x300] sm:$0xff] %v670
      %703 = vst [vmem:[#allocation3 + $0x348] sm:$0xff] %v671
      %704 = vst [vmem:[#allocation3 + $0x390] sm:$0xff] %v672
      %705 = vst [vmem:[#allocation3 + $0x3d8] sm:$0xff] %v673
      %706 = vst [vmem:[#allocation3 + $0x420] sm:$0xff] %v674
      %707 = vst [vmem:[#allocation3 + $0x468] sm:$0xff] %v675
      %708 = vst [vmem:[#allocation3 + $0x4b0] sm:$0xff] %v676
      %709 = vst [vmem:[#allocation3 + $0x4f8] sm:$0xff] %v677
      %710 = vst [vmem:[#allocation3 + $0x540] sm:$0xff] %v678
      %711 = vst [vmem:[#allocation3 + $0x588] sm:$0xff] %v679
      %712 = vst [vmem:[#allocation3 + $0x5d0] sm:$0xff] %v680
      %713 = vst [vmem:[#allocation3 + $0x618] sm:$0xff] %v681
      %714 = vst [vmem:[#allocation3 + $0x660] sm:$0xff] %v682
      %715 = vst [vmem:[#allocation3 + $0x6a8] sm:$0xff] %v683
      %716 = vst [vmem:[#allocation3 + $0x6f0] sm:$0xff] %v684
      %717 = vst [vmem:[#allocation3 + $0x738] sm:$0xff] %v685
      %718 = vst [vmem:[#allocation3 + $0x780] sm:$0xff] %v686
      %719 = vst [vmem:[#allocation3 + $0x7c8] sm:$0xff] %v687
      %720 = vst [vmem:[#allocation3 + $0x810] sm:$0xff] %v688
      %721 = vst [vmem:[#allocation3 + $0x858] sm:$0xff] %v689
      %722 = vst [vmem:[#allocation3 + $0x8a0] sm:$0xff] %v690
      %723 = vst [vmem:[#allocation3 + $0x8e8] sm:$0xff] %v691
      %v724 = vld [vmem:[%s659 + $0x1] sm:$0xff]
      %v725 = vld [vmem:[%s659 + $0x9] sm:$0xff]
      %v726 = vld [vmem:[%s659 + $0x19] sm:$0xff]
      %v727 = vld [vmem:[%s659 + $0x21] sm:$0xff]
      %v728 = vld [vmem:[%s659 + $0x31] sm:$0xff]
      %v729 = vld [vmem:[%s659 + $0x39] sm:$0xff]
      %v730 = vld [vmem:[%s659 + $0x49] sm:$0xff]
      %v731 = vld [vmem:[%s659 + $0x51] sm:$0xff]
      %v732 = vld [vmem:[%s659 + $0x61] sm:$0xff]
      %v733 = vld [vmem:[%s659 + $0x69] sm:$0xff]
      %v734 = vld [vmem:[%s659 + $0x79] sm:$0xff]
      %v735 = vld [vmem:[%s659 + $0x81] sm:$0xff]
      %v736 = vld [vmem:[%s659 + $0x91] sm:$0xff]
      %v737 = vld [vmem:[%s659 + $0x99] sm:$0xff]
      %v738 = vld [vmem:[%s659 + $0xa9] sm:$0xff]
      %v739 = vld [vmem:[%s659 + $0xb1] sm:$0xff]
      %v740 = vld [vmem:[%s659 + $0xc1] sm:$0xff]
      %v741 = vld [vmem:[%s659 + $0xc9] sm:$0xff]
      %v742 = vld [vmem:[%s659 + $0xd9] sm:$0xff]
      %v743 = vld [vmem:[%s659 + $0xe1] sm:$0xff]
      %v744 = vld [vmem:[%s659 + $0xf1] sm:$0xff]
      %v745 = vld [vmem:[%s659 + $0xf9] sm:$0xff]
      %v746 = vld [vmem:[%s659 + $0x109] sm:$0xff]
      %v747 = vld [vmem:[%s659 + $0x111] sm:$0xff]
      %v748 = vld [vmem:[%s659 + $0x121] sm:$0xff]
      %v749 = vld [vmem:[%s659 + $0x129] sm:$0xff]
      %v750 = vld [vmem:[%s659 + $0x139] sm:$0xff]
      %v751 = vld [vmem:[%s659 + $0x141] sm:$0xff]
      %v752 = vld [vmem:[%s659 + $0x151] sm:$0xff]
      %v753 = vld [vmem:[%s659 + $0x159] sm:$0xff]
      %v754 = vld [vmem:[%s659 + $0x169] sm:$0xff]
      %v755 = vld [vmem:[%s659 + $0x171] sm:$0xff]
      %756 = vst [vmem:[#allocation3 + $0x38] sm:$0xff] %v724
      %757 = vst [vmem:[#allocation3 + $0x80] sm:$0xff] %v725
      %758 = vst [vmem:[#allocation3 + $0xc8] sm:$0xff] %v726
      %759 = vst [vmem:[#allocation3 + $0x110] sm:$0xff] %v727
      %760 = vst [vmem:[#allocation3 + $0x158] sm:$0xff] %v728
      %761 = vst [vmem:[#allocation3 + $0x1a0] sm:$0xff] %v729
      %762 = vst [vmem:[#allocation3 + $0x1e8] sm:$0xff] %v730
      %763 = vst [vmem:[#allocation3 + $0x230] sm:$0xff] %v731
      %764 = vst [vmem:[#allocation3 + $0x278] sm:$0xff] %v732
      %765 = vst [vmem:[#allocation3 + $0x2c0] sm:$0xff] %v733
      %766 = vst [vmem:[#allocation3 + $0x308] sm:$0xff] %v734
      %767 = vst [vmem:[#allocation3 + $0x350] sm:$0xff] %v735
      %768 = vst [vmem:[#allocation3 + $0x398] sm:$0xff] %v736
      %769 = vst [vmem:[#allocation3 + $0x3e0] sm:$0xff] %v737
      %770 = vst [vmem:[#allocation3 + $0x428] sm:$0xff] %v738
      %771 = vst [vmem:[#allocation3 + $0x470] sm:$0xff] %v739
      %772 = vst [vmem:[#allocation3 + $0x4b8] sm:$0xff] %v740
      %773 = vst [vmem:[#allocation3 + $0x500] sm:$0xff] %v741
      %774 = vst [vmem:[#allocation3 + $0x548] sm:$0xff] %v742
      %775 = vst [vmem:[#allocation3 + $0x590] sm:$0xff] %v743
      %776 = vst [vmem:[#allocation3 + $0x5d8] sm:$0xff] %v744
      %777 = vst [vmem:[#allocation3 + $0x620] sm:$0xff] %v745
      %778 = vst [vmem:[#allocation3 + $0x668] sm:$0xff] %v746
      %779 = vst [vmem:[#allocation3 + $0x6b0] sm:$0xff] %v747
      %780 = vst [vmem:[#allocation3 + $0x6f8] sm:$0xff] %v748
      %781 = vst [vmem:[#allocation3 + $0x740] sm:$0xff] %v749
      %782 = vst [vmem:[#allocation3 + $0x788] sm:$0xff] %v750
      %783 = vst [vmem:[#allocation3 + $0x7d0] sm:$0xff] %v751
      %784 = vst [vmem:[#allocation3 + $0x818] sm:$0xff] %v752
      %785 = vst [vmem:[#allocation3 + $0x860] sm:$0xff] %v753
      %786 = vst [vmem:[#allocation3 + $0x8a8] sm:$0xff] %v754
      %787 = vst [vmem:[#allocation3 + $0x8f0] sm:$0xff] %v755
      %v788 = vld [vmem:[%s659 + $0x2] sm:$0xff]
      %v789 = vld [vmem:[%s659 + $0xa] sm:$0xff]
      %v790 = vld [vmem:[%s659 + $0x1a] sm:$0xff]
      %v791 = vld [vmem:[%s659 + $0x22] sm:$0xff]
      %v792 = vld [vmem:[%s659 + $0x32] sm:$0xff]
      %v793 = vld [vmem:[%s659 + $0x3a] sm:$0xff]
      %v794 = vld [vmem:[%s659 + $0x4a] sm:$0xff]
      %v795 = vld [vmem:[%s659 + $0x52] sm:$0xff]
      %v796 = vld [vmem:[%s659 + $0x62] sm:$0xff]
      %v797 = vld [vmem:[%s659 + $0x6a] sm:$0xff]
      %v798 = vld [vmem:[%s659 + $0x7a] sm:$0xff]
      %v799 = vld [vmem:[%s659 + $0x82] sm:$0xff]
      %v800 = vld [vmem:[%s659 + $0x92] sm:$0xff]
      %v801 = vld [vmem:[%s659 + $0x9a] sm:$0xff]
      %v802 = vld [vmem:[%s659 + $0xaa] sm:$0xff]
      %v803 = vld [vmem:[%s659 + $0xb2] sm:$0xff]
      %v804 = vld [vmem:[%s659 + $0xc2] sm:$0xff]
      %v805 = vld [vmem:[%s659 + $0xca] sm:$0xff]
      %v806 = vld [vmem:[%s659 + $0xda] sm:$0xff]
      %v807 = vld [vmem:[%s659 + $0xe2] sm:$0xff]
      %v808 = vld [vmem:[%s659 + $0xf2] sm:$0xff]
      %v809 = vld [vmem:[%s659 + $0xfa] sm:$0xff]
      %v810 = vld [vmem:[%s659 + $0x10a] sm:$0xff]
      %v811 = vld [vmem:[%s659 + $0x112] sm:$0xff]
      %v812 = vld [vmem:[%s659 + $0x122] sm:$0xff]
      %v813 = vld [vmem:[%s659 + $0x12a] sm:$0xff]
      %v814 = vld [vmem:[%s659 + $0x13a] sm:$0xff]
      %v815 = vld [vmem:[%s659 + $0x142] sm:$0xff]
      %v816 = vld [vmem:[%s659 + $0x152] sm:$0xff]
      %v817 = vld [vmem:[%s659 + $0x15a] sm:$0xff]
      %v818 = vld [vmem:[%s659 + $0x16a] sm:$0xff]
      %v819 = vld [vmem:[%s659 + $0x172] sm:$0xff]
      %820 = vst [vmem:[#allocation3 + $0x40] sm:$0xff] %v788
      %821 = vst [vmem:[#allocation3 + $0x88] sm:$0xff] %v789
      %822 = vst [vmem:[#allocation3 + $0xd0] sm:$0xff] %v790
      %823 = vst [vmem:[#allocation3 + $0x118] sm:$0xff] %v791
      %824 = vst [vmem:[#allocation3 + $0x160] sm:$0xff] %v792
      %825 = vst [vmem:[#allocation3 + $0x1a8] sm:$0xff] %v793
      %826 = vst [vmem:[#allocation3 + $0x1f0] sm:$0xff] %v794
      %827 = vst [vmem:[#allocation3 + $0x238] sm:$0xff] %v795
      %828 = vst [vmem:[#allocation3 + $0x280] sm:$0xff] %v796
      %829 = vst [vmem:[#allocation3 + $0x2c8] sm:$0xff] %v797
      %830 = vst [vmem:[#allocation3 + $0x310] sm:$0xff] %v798
      %831 = vst [vmem:[#allocation3 + $0x358] sm:$0xff] %v799
      %832 = vst [vmem:[#allocation3 + $0x3a0] sm:$0xff] %v800
      %833 = vst [vmem:[#allocation3 + $0x3e8] sm:$0xff] %v801
      %834 = vst [vmem:[#allocation3 + $0x430] sm:$0xff] %v802
      %835 = vst [vmem:[#allocation3 + $0x478] sm:$0xff] %v803
      %836 = vst [vmem:[#allocation3 + $0x4c0] sm:$0xff] %v804
      %837 = vst [vmem:[#allocation3 + $0x508] sm:$0xff] %v805
      %838 = vst [vmem:[#allocation3 + $0x550] sm:$0xff] %v806
      %839 = vst [vmem:[#allocation3 + $0x598] sm:$0xff] %v807
      %840 = vst [vmem:[#allocation3 + $0x5e0] sm:$0xff] %v808
      %841 = vst [vmem:[#allocation3 + $0x628] sm:$0xff] %v809
      %842 = vst [vmem:[#allocation3 + $0x670] sm:$0xff] %v810
      %843 = vst [vmem:[#allocation3 + $0x6b8] sm:$0xff] %v811
      %844 = vst [vmem:[#allocation3 + $0x700] sm:$0xff] %v812
      %845 = vst [vmem:[#allocation3 + $0x748] sm:$0xff] %v813
      %846 = vst [vmem:[#allocation3 + $0x790] sm:$0xff] %v814
      %847 = vst [vmem:[#allocation3 + $0x7d8] sm:$0xff] %v815
      %848 = vst [vmem:[#allocation3 + $0x820] sm:$0xff] %v816
      %849 = vst [vmem:[#allocation3 + $0x868] sm:$0xff] %v817
      %850 = vst [vmem:[#allocation3 + $0x8b0] sm:$0xff] %v818
      %851 = vst [vmem:[#allocation3 + $0x8f8] sm:$0xff] %v819
      %v852 = vld [vmem:[#allocation3] sm:$0xff]
      %v853 = vld [vmem:[#allocation3 + $0x8] sm:$0xff]
      %v854 = vld [vmem:[#allocation3 + $0x10] sm:$0xff]
      %v855 = vld [vmem:[#allocation3 + $0x18] sm:$0xff]
      %v856 = vld [vmem:[#allocation3 + $0x20] sm:$0xff]
      %v857 = vld [vmem:[#allocation3 + $0x28] sm:$0xff]
      %v858 = vld [vmem:[#allocation3 + $0x30] sm:$0xff]
      %v859 = vld [vmem:[#allocation3 + $0x38] sm:$0xff]
      %v860 = vld [vmem:[#allocation3 + $0x40] sm:$0xff]
      %v861 = vld [vmem:[#allocation3 + $0x48] sm:$0xff]
      %v862 = vld [vmem:[#allocation3 + $0x50] sm:$0xff]
      %v863 = vld [vmem:[#allocation3 + $0x58] sm:$0xff]
      %v864 = vld [vmem:[#allocation3 + $0x60] sm:$0xff]
      %v865 = vld [vmem:[#allocation3 + $0x68] sm:$0xff]
      %v866 = vld [vmem:[#allocation3 + $0x70] sm:$0xff]
      %v867 = vld [vmem:[#allocation3 + $0x78] sm:$0xff]
      %v868 = vld [vmem:[#allocation3 + $0x80] sm:$0xff]
      %v869 = vld [vmem:[#allocation3 + $0x88] sm:$0xff]
      %v870 = vld [vmem:[#allocation3 + $0x90] sm:$0xff]
      %v871 = vld [vmem:[#allocation3 + $0x98] sm:$0xff]
      %v872 = vld [vmem:[#allocation3 + $0xa0] sm:$0xff]
      %v873 = vld [vmem:[#allocation3 + $0xa8] sm:$0xff]
      %v874 = vld [vmem:[#allocation3 + $0xb0] sm:$0xff]
      %v875 = vld [vmem:[#allocation3 + $0xb8] sm:$0xff]
      %v876 = vld [vmem:[#allocation3 + $0xc0] sm:$0xff]
      %v877 = vld [vmem:[#allocation3 + $0xc8] sm:$0xff]
      %v878 = vld [vmem:[#allocation3 + $0xd0] sm:$0xff]
      %v879 = vld [vmem:[#allocation3 + $0xd8] sm:$0xff]
      %v880 = vld [vmem:[#allocation3 + $0xe0] sm:$0xff]
      %v881 = vld [vmem:[#allocation3 + $0xe8] sm:$0xff]
      %v882 = vld [vmem:[#allocation3 + $0xf0] sm:$0xff]
      %v883 = vld [vmem:[#allocation3 + $0xf8] sm:$0xff]
      %v884 = vld [vmem:[#allocation3 + $0x100] sm:$0xff]
      %v885 = vld [vmem:[#allocation3 + $0x108] sm:$0xff]
      %v886 = vld [vmem:[#allocation3 + $0x110] sm:$0xff]
      %v887 = vld [vmem:[#allocation3 + $0x118] sm:$0xff]
      %v888 = vld [vmem:[#allocation3 + $0x120] sm:$0xff]
      %v889 = vld [vmem:[#allocation3 + $0x128] sm:$0xff]
      %v890 = vld [vmem:[#allocation3 + $0x130] sm:$0xff]
      %v891 = vld [vmem:[#allocation3 + $0x138] sm:$0xff]
      %v892 = vld [vmem:[#allocation3 + $0x140] sm:$0xff]
      %v893 = vld [vmem:[#allocation3 + $0x148] sm:$0xff]
      %v894 = vld [vmem:[#allocation3 + $0x150] sm:$0xff]
      %v895 = vld [vmem:[#allocation3 + $0x158] sm:$0xff]
      %v896 = vld [vmem:[#allocation3 + $0x160] sm:$0xff]
      %v897 = vld [vmem:[#allocation3 + $0x168] sm:$0xff]
      %v898 = vld [vmem:[#allocation3 + $0x170] sm:$0xff]
      %v899 = vld [vmem:[#allocation3 + $0x178] sm:$0xff]
      %v900 = vld [vmem:[#allocation3 + $0x180] sm:$0xff]
      %v901 = vld [vmem:[#allocation3 + $0x188] sm:$0xff]
      %v902 = vld [vmem:[#allocation3 + $0x190] sm:$0xff]
      %v903 = vld [vmem:[#allocation3 + $0x198] sm:$0xff]
      %v904 = vld [vmem:[#allocation3 + $0x1a0] sm:$0xff]
      %v905 = vld [vmem:[#allocation3 + $0x1a8] sm:$0xff]
      %v906 = vld [vmem:[#allocation3 + $0x1b0] sm:$0xff]
      %v907 = vld [vmem:[#allocation3 + $0x1b8] sm:$0xff]
      %v908 = vld [vmem:[#allocation3 + $0x1c0] sm:$0xff]
      %v909 = vld [vmem:[#allocation3 + $0x1c8] sm:$0xff]
      %v910 = vld [vmem:[#allocation3 + $0x1d0] sm:$0xff]
      %v911 = vld [vmem:[#allocation3 + $0x1d8] sm:$0xff]
      %v912 = vld [vmem:[#allocation3 + $0x1e0] sm:$0xff]
      %v913 = vld [vmem:[#allocation3 + $0x1e8] sm:$0xff]
      %v914 = vld [vmem:[#allocation3 + $0x1f0] sm:$0xff]
      %v915 = vld [vmem:[#allocation3 + $0x1f8] sm:$0xff]
      %v916 = vld [vmem:[#allocation3 + $0x200] sm:$0xff]
      %v917 = vld [vmem:[#allocation3 + $0x208] sm:$0xff]
      %v918 = vld [vmem:[#allocation3 + $0x210] sm:$0xff]
      %v919 = vld [vmem:[#allocation3 + $0x218] sm:$0xff]
      %v920 = vld [vmem:[#allocation3 + $0x220] sm:$0xff]
      %v921 = vld [vmem:[#allocation3 + $0x228] sm:$0xff]
      %v922 = vld [vmem:[#allocation3 + $0x230] sm:$0xff]
      %v923 = vld [vmem:[#allocation3 + $0x238] sm:$0xff]
      %v924 = vld [vmem:[#allocation3 + $0x240] sm:$0xff]
      %v925 = vld [vmem:[#allocation3 + $0x248] sm:$0xff]
      %v926 = vld [vmem:[#allocation3 + $0x250] sm:$0xff]
      %v927 = vld [vmem:[#allocation3 + $0x258] sm:$0xff]
      %v928 = vld [vmem:[#allocation3 + $0x260] sm:$0xff]
      %v929 = vld [vmem:[#allocation3 + $0x268] sm:$0xff]
      %v930 = vld [vmem:[#allocation3 + $0x270] sm:$0xff]
      %v931 = vld [vmem:[#allocation3 + $0x278] sm:$0xff]
      %v932 = vld [vmem:[#allocation3 + $0x280] sm:$0xff]
      %v933 = vld [vmem:[#allocation3 + $0x288] sm:$0xff]
      %v934 = vld [vmem:[#allocation3 + $0x290] sm:$0xff]
      %v935 = vld [vmem:[#allocation3 + $0x298] sm:$0xff]
      %v936 = vld [vmem:[#allocation3 + $0x2a0] sm:$0xff]
      %v937 = vld [vmem:[#allocation3 + $0x2a8] sm:$0xff]
      %v938 = vld [vmem:[#allocation3 + $0x2b0] sm:$0xff]
      %v939 = vld [vmem:[#allocation3 + $0x2b8] sm:$0xff]
      %v940 = vld [vmem:[#allocation3 + $0x2c0] sm:$0xff]
      %v941 = vld [vmem:[#allocation3 + $0x2c8] sm:$0xff]
      %v942 = vld [vmem:[#allocation3 + $0x2d0] sm:$0xff]
      %v943 = vld [vmem:[#allocation3 + $0x2d8] sm:$0xff]
      %v944 = vld [vmem:[#allocation3 + $0x2e0] sm:$0xff]
      %v945 = vld [vmem:[#allocation3 + $0x2e8] sm:$0xff]
      %v946 = vld [vmem:[#allocation3 + $0x2f0] sm:$0xff]
      %v947 = vld [vmem:[#allocation3 + $0x2f8] sm:$0xff]
      %v948 = vld [vmem:[#allocation3 + $0x300] sm:$0xff]
      %v949 = vld [vmem:[#allocation3 + $0x308] sm:$0xff]
      %v950 = vld [vmem:[#allocation3 + $0x310] sm:$0xff]
      %v951 = vld [vmem:[#allocation3 + $0x318] sm:$0xff]
      %v952 = vld [vmem:[#allocation3 + $0x320] sm:$0xff]
      %v953 = vld [vmem:[#allocation3 + $0x328] sm:$0xff]
      %v954 = vld [vmem:[#allocation3 + $0x330] sm:$0xff]
      %v955 = vld [vmem:[#allocation3 + $0x338] sm:$0xff]
      %v956 = vld [vmem:[#allocation3 + $0x340] sm:$0xff]
      %v957 = vld [vmem:[#allocation3 + $0x348] sm:$0xff]
      %v958 = vld [vmem:[#allocation3 + $0x350] sm:$0xff]
      %v959 = vld [vmem:[#allocation3 + $0x358] sm:$0xff]
      %v960 = vld [vmem:[#allocation3 + $0x360] sm:$0xff]
      %v961 = vld [vmem:[#allocation3 + $0x368] sm:$0xff]
      %v962 = vld [vmem:[#allocation3 + $0x370] sm:$0xff]
      %v963 = vld [vmem:[#allocation3 + $0x378] sm:$0xff]
      %v964 = vld [vmem:[#allocation3 + $0x380] sm:$0xff]
      %v965 = vld [vmem:[#allocation3 + $0x388] sm:$0xff]
      %v966 = vld [vmem:[#allocation3 + $0x390] sm:$0xff]
      %v967 = vld [vmem:[#allocation3 + $0x398] sm:$0xff]
      %v968 = vld [vmem:[#allocation3 + $0x3a0] sm:$0xff]
      %v969 = vld [vmem:[#allocation3 + $0x3a8] sm:$0xff]
      %v970 = vld [vmem:[#allocation3 + $0x3b0] sm:$0xff]
      %v971 = vld [vmem:[#allocation3 + $0x3b8] sm:$0xff]
      %v972 = vld [vmem:[#allocation3 + $0x3c0] sm:$0xff]
      %v973 = vld [vmem:[#allocation3 + $0x3c8] sm:$0xff]
      %v974 = vld [vmem:[#allocation3 + $0x3d0] sm:$0xff]
      %v975 = vld [vmem:[#allocation3 + $0x3d8] sm:$0xff]
      %v976 = vld [vmem:[#allocation3 + $0x3e0] sm:$0xff]
      %v977 = vld [vmem:[#allocation3 + $0x3e8] sm:$0xff]
      %v978 = vld [vmem:[#allocation3 + $0x3f0] sm:$0xff]
      %v979 = vld [vmem:[#allocation3 + $0x3f8] sm:$0xff]
      %v980 = vld [vmem:[#allocation3 + $0x400] sm:$0xff]
      %v981 = vld [vmem:[#allocation3 + $0x408] sm:$0xff]
      %v982 = vld [vmem:[#allocation3 + $0x410] sm:$0xff]
      %v983 = vld [vmem:[#allocation3 + $0x418] sm:$0xff]
      %v984 = vld [vmem:[#allocation3 + $0x420] sm:$0xff]
      %v985 = vld [vmem:[#allocation3 + $0x428] sm:$0xff]
      %v986 = vld [vmem:[#allocation3 + $0x430] sm:$0xff]
      %v987 = vld [vmem:[#allocation3 + $0x438] sm:$0xff]
      %v988 = vld [vmem:[#allocation3 + $0x440] sm:$0xff]
      %v989 = vld [vmem:[#allocation3 + $0x448] sm:$0xff]
      %v990 = vld [vmem:[#allocation3 + $0x450] sm:$0xff]
      %v991 = vld [vmem:[#allocation3 + $0x458] sm:$0xff]
      %v992 = vld [vmem:[#allocation3 + $0x460] sm:$0xff]
      %v993 = vld [vmem:[#allocation3 + $0x468] sm:$0xff]
      %v994 = vld [vmem:[#allocation3 + $0x470] sm:$0xff]
      %v995 = vld [vmem:[#allocation3 + $0x478] sm:$0xff]
      %v996 = vld [vmem:[#allocation3 + $0x480] sm:$0xff]
      %v997 = vld [vmem:[#allocation3 + $0x488] sm:$0xff]
      %v998 = vld [vmem:[#allocation3 + $0x490] sm:$0xff]
      %v999 = vld [vmem:[#allocation3 + $0x498] sm:$0xff]
      %v1000 = vld [vmem:[#allocation3 + $0x4a0] sm:$0xff]
      %v1001 = vld [vmem:[#allocation3 + $0x4a8] sm:$0xff]
      %v1002 = vld [vmem:[#allocation3 + $0x4b0] sm:$0xff]
      %v1003 = vld [vmem:[#allocation3 + $0x4b8] sm:$0xff]
      %v1004 = vld [vmem:[#allocation3 + $0x4c0] sm:$0xff]
      %v1005 = vld [vmem:[#allocation3 + $0x4c8] sm:$0xff]
      %v1006 = vld [vmem:[#allocation3 + $0x4d0] sm:$0xff]
      %v1007 = vld [vmem:[#allocation3 + $0x4d8] sm:$0xff]
      %v1008 = vld [vmem:[#allocation3 + $0x4e0] sm:$0xff]
      %v1009 = vld [vmem:[#allocation3 + $0x4e8] sm:$0xff]
      %v1010 = vld [vmem:[#allocation3 + $0x4f0] sm:$0xff]
      %v1011 = vld [vmem:[#allocation3 + $0x4f8] sm:$0xff]
      %v1012 = vld [vmem:[#allocation3 + $0x500] sm:$0xff]
      %v1013 = vld [vmem:[#allocation3 + $0x508] sm:$0xff]
      %v1014 = vld [vmem:[#allocation3 + $0x510] sm:$0xff]
      %v1015 = vld [vmem:[#allocation3 + $0x518] sm:$0xff]
      %v1016 = vld [vmem:[#allocation3 + $0x520] sm:$0xff]
      %v1017 = vld [vmem:[#allocation3 + $0x528] sm:$0xff]
      %v1018 = vld [vmem:[#allocation3 + $0x530] sm:$0xff]
      %v1019 = vld [vmem:[#allocation3 + $0x538] sm:$0xff]
      %v1020 = vld [vmem:[#allocation3 + $0x540] sm:$0xff]
      %v1021 = vld [vmem:[#allocation3 + $0x548] sm:$0xff]
      %v1022 = vld [vmem:[#allocation3 + $0x550] sm:$0xff]
      %v1023 = vld [vmem:[#allocation3 + $0x558] sm:$0xff]
      %v1024 = vld [vmem:[#allocation3 + $0x560] sm:$0xff]
      %v1025 = vld [vmem:[#allocation3 + $0x568] sm:$0xff]
      %v1026 = vld [vmem:[#allocation3 + $0x570] sm:$0xff]
      %v1027 = vld [vmem:[#allocation3 + $0x578] sm:$0xff]
      %v1028 = vld [vmem:[#allocation3 + $0x580] sm:$0xff]
      %v1029 = vld [vmem:[#allocation3 + $0x588] sm:$0xff]
      %v1030 = vld [vmem:[#allocation3 + $0x590] sm:$0xff]
      %v1031 = vld [vmem:[#allocation3 + $0x598] sm:$0xff]
      %v1032 = vld [vmem:[#allocation3 + $0x5a0] sm:$0xff]
      %v1033 = vld [vmem:[#allocation3 + $0x5a8] sm:$0xff]
      %v1034 = vld [vmem:[#allocation3 + $0x5b0] sm:$0xff]
      %v1035 = vld [vmem:[#allocation3 + $0x5b8] sm:$0xff]
      %v1036 = vld [vmem:[#allocation3 + $0x5c0] sm:$0xff]
      %v1037 = vld [vmem:[#allocation3 + $0x5c8] sm:$0xff]
      %v1038 = vld [vmem:[#allocation3 + $0x5d0] sm:$0xff]
      %v1039 = vld [vmem:[#allocation3 + $0x5d8] sm:$0xff]
      %v1040 = vld [vmem:[#allocation3 + $0x5e0] sm:$0xff]
      %v1041 = vld [vmem:[#allocation3 + $0x5e8] sm:$0xff]
      %v1042 = vld [vmem:[#allocation3 + $0x5f0] sm:$0xff]
      %v1043 = vld [vmem:[#allocation3 + $0x5f8] sm:$0xff]
      %v1044 = vld [vmem:[#allocation3 + $0x600] sm:$0xff]
      %v1045 = vld [vmem:[#allocation3 + $0x608] sm:$0xff]
      %v1046 = vld [vmem:[#allocation3 + $0x610] sm:$0xff]
      %v1047 = vld [vmem:[#allocation3 + $0x618] sm:$0xff]
      %v1048 = vld [vmem:[#allocation3 + $0x620] sm:$0xff]
      %v1049 = vld [vmem:[#allocation3 + $0x628] sm:$0xff]
      %v1050 = vld [vmem:[#allocation3 + $0x630] sm:$0xff]
      %v1051 = vld [vmem:[#allocation3 + $0x638] sm:$0xff]
      %v1052 = vld [vmem:[#allocation3 + $0x640] sm:$0xff]
      %v1053 = vld [vmem:[#allocation3 + $0x648] sm:$0xff]
      %v1054 = vld [vmem:[#allocation3 + $0x650] sm:$0xff]
      %v1055 = vld [vmem:[#allocation3 + $0x658] sm:$0xff]
      %v1056 = vld [vmem:[#allocation3 + $0x660] sm:$0xff]
      %v1057 = vld [vmem:[#allocation3 + $0x668] sm:$0xff]
      %v1058 = vld [vmem:[#allocation3 + $0x670] sm:$0xff]
      %v1059 = vld [vmem:[#allocation3 + $0x678] sm:$0xff]
      %v1060 = vld [vmem:[#allocation3 + $0x680] sm:$0xff]
      %v1061 = vld [vmem:[#allocation3 + $0x688] sm:$0xff]
      %v1062 = vld [vmem:[#allocation3 + $0x690] sm:$0xff]
      %v1063 = vld [vmem:[#allocation3 + $0x698] sm:$0xff]
      %v1064 = vld [vmem:[#allocation3 + $0x6a0] sm:$0xff]
      %v1065 = vld [vmem:[#allocation3 + $0x6a8] sm:$0xff]
      %v1066 = vld [vmem:[#allocation3 + $0x6b0] sm:$0xff]
      %v1067 = vld [vmem:[#allocation3 + $0x6b8] sm:$0xff]
      %v1068 = vld [vmem:[#allocation3 + $0x6c0] sm:$0xff]
      %v1069 = vld [vmem:[#allocation3 + $0x6c8] sm:$0xff]
      %v1070 = vld [vmem:[#allocation3 + $0x6d0] sm:$0xff]
      %v1071 = vld [vmem:[#allocation3 + $0x6d8] sm:$0xff]
      %v1072 = vld [vmem:[#allocation3 + $0x6e0] sm:$0xff]
      %v1073 = vld [vmem:[#allocation3 + $0x6e8] sm:$0xff]
      %v1074 = vld [vmem:[#allocation3 + $0x6f0] sm:$0xff]
      %v1075 = vld [vmem:[#allocation3 + $0x6f8] sm:$0xff]
      %v1076 = vld [vmem:[#allocation3 + $0x700] sm:$0xff]
      %v1077 = vld [vmem:[#allocation3 + $0x708] sm:$0xff]
      %v1078 = vld [vmem:[#allocation3 + $0x710] sm:$0xff]
      %v1079 = vld [vmem:[#allocation3 + $0x718] sm:$0xff]
      %v1080 = vld [vmem:[#allocation3 + $0x720] sm:$0xff]
      %v1081 = vld [vmem:[#allocation3 + $0x728] sm:$0xff]
      %v1082 = vld [vmem:[#allocation3 + $0x730] sm:$0xff]
      %v1083 = vld [vmem:[#allocation3 + $0x738] sm:$0xff]
      %v1084 = vld [vmem:[#allocation3 + $0x740] sm:$0xff]
      %v1085 = vld [vmem:[#allocation3 + $0x748] sm:$0xff]
      %v1086 = vld [vmem:[#allocation3 + $0x750] sm:$0xff]
      %v1087 = vld [vmem:[#allocation3 + $0x758] sm:$0xff]
      %v1088 = vld [vmem:[#allocation3 + $0x760] sm:$0xff]
      %v1089 = vld [vmem:[#allocation3 + $0x768] sm:$0xff]
      %v1090 = vld [vmem:[#allocation3 + $0x770] sm:$0xff]
      %v1091 = vld [vmem:[#allocation3 + $0x778] sm:$0xff]
      %v1092 = vld [vmem:[#allocation3 + $0x780] sm:$0xff]
      %v1093 = vld [vmem:[#allocation3 + $0x788] sm:$0xff]
      %v1094 = vld [vmem:[#allocation3 + $0x790] sm:$0xff]
      %v1095 = vld [vmem:[#allocation3 + $0x798] sm:$0xff]
      %v1096 = vld [vmem:[#allocation3 + $0x7a0] sm:$0xff]
      %v1097 = vld [vmem:[#allocation3 + $0x7a8] sm:$0xff]
      %v1098 = vld [vmem:[#allocation3 + $0x7b0] sm:$0xff]
      %v1099 = vld [vmem:[#allocation3 + $0x7b8] sm:$0xff]
      %v1100 = vld [vmem:[#allocation3 + $0x7c0] sm:$0xff]
      %v1101 = vld [vmem:[#allocation3 + $0x7c8] sm:$0xff]
      %v1102 = vld [vmem:[#allocation3 + $0x7d0] sm:$0xff]
      %v1103 = vld [vmem:[#allocation3 + $0x7d8] sm:$0xff]
      %v1104 = vld [vmem:[#allocation3 + $0x7e0] sm:$0xff]
      %v1105 = vld [vmem:[#allocation3 + $0x7e8] sm:$0xff]
      %v1106 = vld [vmem:[#allocation3 + $0x7f0] sm:$0xff]
      %v1107 = vld [vmem:[#allocation3 + $0x7f8] sm:$0xff]
      %v1108 = vld [vmem:[#allocation3 + $0x800] sm:$0xff]
      %v1109 = vld [vmem:[#allocation3 + $0x808] sm:$0xff]
      %v1110 = vld [vmem:[#allocation3 + $0x810] sm:$0xff]
      %v1111 = vld [vmem:[#allocation3 + $0x818] sm:$0xff]
      %v1112 = vld [vmem:[#allocation3 + $0x820] sm:$0xff]
      %v1113 = vld [vmem:[#allocation3 + $0x828] sm:$0xff]
      %v1114 = vld [vmem:[#allocation3 + $0x830] sm:$0xff]
      %v1115 = vld [vmem:[#allocation3 + $0x838] sm:$0xff]
      %v1116 = vld [vmem:[#allocation3 + $0x840] sm:$0xff]
      %v1117 = vld [vmem:[#allocation3 + $0x848] sm:$0xff]
      %v1118 = vld [vmem:[#allocation3 + $0x850] sm:$0xff]
      %v1119 = vld [vmem:[#allocation3 + $0x858] sm:$0xff]
      %v1120 = vld [vmem:[#allocation3 + $0x860] sm:$0xff]
      %v1121 = vld [vmem:[#allocation3 + $0x868] sm:$0xff]
      %v1122 = vld [vmem:[#allocation3 + $0x870] sm:$0xff]
      %v1123 = vld [vmem:[#allocation3 + $0x878] sm:$0xff]
      %v1124 = vld [vmem:[#allocation3 + $0x880] sm:$0xff]
      %v1125 = vld [vmem:[#allocation3 + $0x888] sm:$0xff]
      %v1126 = vld [vmem:[#allocation3 + $0x890] sm:$0xff]
      %v1127 = vld [vmem:[#allocation3 + $0x898] sm:$0xff]
      %v1128 = vld [vmem:[#allocation3 + $0x8a0] sm:$0xff]
      %v1129 = vld [vmem:[#allocation3 + $0x8a8] sm:$0xff]
      %v1130 = vld [vmem:[#allocation3 + $0x8b0] sm:$0xff]
      %v1131 = vld [vmem:[#allocation3 + $0x8b8] sm:$0xff]
      %v1132 = vld [vmem:[#allocation3 + $0x8c0] sm:$0xff]
      %v1133 = vld [vmem:[#allocation3 + $0x8c8] sm:$0xff]
      %v1134 = vld [vmem:[#allocation3 + $0x8d0] sm:$0xff]
      %v1135 = vld [vmem:[#allocation3 + $0x8d8] sm:$0xff]
      %v1136 = vld [vmem:[#allocation3 + $0x8e0] sm:$0xff]
      %v1137 = vld [vmem:[#allocation3 + $0x8e8] sm:$0xff]
      %v1138 = vld [vmem:[#allocation3 + $0x8f0] sm:$0xff]
      %v1139 = vld [vmem:[#allocation3 + $0x8f8] sm:$0xff]
      %v1140 = vld [vmem:[%s1] sm:$0xff]
      %v1141 = vld [vmem:[%s1 + $0x8] sm:$0xff]
      %v1142 = vld [vmem:[%s1 + $0x10] sm:$0xff]
      %v1143 = vld [vmem:[%s1 + $0x18] sm:$0xff]
      %v1144 = vld [vmem:[%s1 + $0x20] sm:$0xff]
      %v1145 = vld [vmem:[%s1 + $0x28] sm:$0xff]
      %v1146 = vld [vmem:[%s1 + $0x30] sm:$0xff]
      %v1147 = vld [vmem:[%s1 + $0x38] sm:$0xff]
      %v1148 = vld [vmem:[%s1 + $0x40] sm:$0xff]
      %v1149 = vld [vmem:[%s1 + $0x48] sm:$0xff]
      %v1150 = vld [vmem:[%s1 + $0x50] sm:$0xff]
      %v1151 = vld [vmem:[%s1 + $0x58] sm:$0xff]
      %v1152 = vld [vmem:[%s1 + $0x60] sm:$0xff]
      %v1153 = vld [vmem:[%s1 + $0x68] sm:$0xff]
      %v1154 = vld [vmem:[%s1 + $0x70] sm:$0xff]
      %v1155 = vld [vmem:[%s1 + $0x78] sm:$0xff]
      %v1156 = vld [vmem:[%s1 + $0x80] sm:$0xff]
      %v1157 = vld [vmem:[%s1 + $0x88] sm:$0xff]
      %v1158 = vld [vmem:[%s1 + $0x90] sm:$0xff]
      %v1159 = vld [vmem:[%s1 + $0x98] sm:$0xff]
      %v1160 = vld [vmem:[%s1 + $0xa0] sm:$0xff]
      %v1161 = vld [vmem:[%s1 + $0xa8] sm:$0xff]
      %v1162 = vld [vmem:[%s1 + $0xb0] sm:$0xff]
      %v1163 = vld [vmem:[%s1 + $0xb8] sm:$0xff]
      %v1164 = vld [vmem:[%s1 + $0xc0] sm:$0xff]
      %v1165 = vld [vmem:[%s1 + $0xc8] sm:$0xff]
      %v1166 = vld [vmem:[%s1 + $0xd0] sm:$0xff]
      %v1167 = vld [vmem:[%s1 + $0xd8] sm:$0xff]
      %v1168 = vld [vmem:[%s1 + $0xe0] sm:$0xff]
      %v1169 = vld [vmem:[%s1 + $0xe8] sm:$0xff]
      %v1170 = vld [vmem:[%s1 + $0xf0] sm:$0xff]
      %v1171 = vld [vmem:[%s1 + $0xf8] sm:$0xff]
      %v1172 = vld [vmem:[%s1 + $0x100] sm:$0xff]
      %v1173 = vld [vmem:[%s1 + $0x108] sm:$0xff]
      %v1174 = vld [vmem:[%s1 + $0x110] sm:$0xff]
      %v1175 = vld [vmem:[%s1 + $0x118] sm:$0xff]
      %v1176 = vld [vmem:[%s1 + $0x120] sm:$0xff]
      %v1177 = vld [vmem:[%s1 + $0x128] sm:$0xff]
      %v1178 = vld [vmem:[%s1 + $0x130] sm:$0xff]
      %v1179 = vld [vmem:[%s1 + $0x138] sm:$0xff]
      %v1180 = vld [vmem:[%s1 + $0x140] sm:$0xff]
      %v1181 = vld [vmem:[%s1 + $0x148] sm:$0xff]
      %v1182 = vld [vmem:[%s1 + $0x150] sm:$0xff]
      %v1183 = vld [vmem:[%s1 + $0x158] sm:$0xff]
      %v1184 = vld [vmem:[%s1 + $0x160] sm:$0xff]
      %v1185 = vld [vmem:[%s1 + $0x168] sm:$0xff]
      %v1186 = vld [vmem:[%s1 + $0x170] sm:$0xff]
      %v1187 = vld [vmem:[%s1 + $0x178] sm:$0xff]
      %v1188 = vld [vmem:[%s1 + $0x180] sm:$0xff]
      %v1189 = vld [vmem:[%s1 + $0x188] sm:$0xff]
      %v1190 = vld [vmem:[%s1 + $0x190] sm:$0xff]
      %v1191 = vld [vmem:[%s1 + $0x198] sm:$0xff]
      %v1192 = vld [vmem:[%s1 + $0x1a0] sm:$0xff]
      %v1193 = vld [vmem:[%s1 + $0x1a8] sm:$0xff]
      %v1194 = vld [vmem:[%s1 + $0x1b0] sm:$0xff]
      %v1195 = vld [vmem:[%s1 + $0x1b8] sm:$0xff]
      %v1196 = vld [vmem:[%s1 + $0x1c0] sm:$0xff]
      %v1197 = vld [vmem:[%s1 + $0x1c8] sm:$0xff]
      %v1198 = vld [vmem:[%s1 + $0x1d0] sm:$0xff]
      %v1199 = vld [vmem:[%s1 + $0x1d8] sm:$0xff]
      %v1200 = vld [vmem:[%s1 + $0x1e0] sm:$0xff]
      %v1201 = vld [vmem:[%s1 + $0x1e8] sm:$0xff]
      %v1202 = vld [vmem:[%s1 + $0x1f0] sm:$0xff]
      %v1203 = vld [vmem:[%s1 + $0x1f8] sm:$0xff]
      %v1204 = vld [vmem:[%s1 + $0x200] sm:$0xff]
      %v1205 = vld [vmem:[%s1 + $0x208] sm:$0xff]
      %v1206 = vld [vmem:[%s1 + $0x210] sm:$0xff]
      %v1207 = vld [vmem:[%s1 + $0x218] sm:$0xff]
      %v1208 = vld [vmem:[%s1 + $0x220] sm:$0xff]
      %v1209 = vld [vmem:[%s1 + $0x228] sm:$0xff]
      %v1210 = vld [vmem:[%s1 + $0x230] sm:$0xff]
      %v1211 = vld [vmem:[%s1 + $0x238] sm:$0xff]
      %v1212 = vld [vmem:[%s1 + $0x240] sm:$0xff]
      %v1213 = vld [vmem:[%s1 + $0x248] sm:$0xff]
      %v1214 = vld [vmem:[%s1 + $0x250] sm:$0xff]
      %v1215 = vld [vmem:[%s1 + $0x258] sm:$0xff]
      %v1216 = vld [vmem:[%s1 + $0x260] sm:$0xff]
      %v1217 = vld [vmem:[%s1 + $0x268] sm:$0xff]
      %v1218 = vld [vmem:[%s1 + $0x270] sm:$0xff]
      %v1219 = vld [vmem:[%s1 + $0x278] sm:$0xff]
      %v1220 = vld [vmem:[%s1 + $0x280] sm:$0xff]
      %v1221 = vld [vmem:[%s1 + $0x288] sm:$0xff]
      %v1222 = vld [vmem:[%s1 + $0x290] sm:$0xff]
      %v1223 = vld [vmem:[%s1 + $0x298] sm:$0xff]
      %v1224 = vld [vmem:[%s1 + $0x2a0] sm:$0xff]
      %v1225 = vld [vmem:[%s1 + $0x2a8] sm:$0xff]
      %v1226 = vld [vmem:[%s1 + $0x2b0] sm:$0xff]
      %v1227 = vld [vmem:[%s1 + $0x2b8] sm:$0xff]
      %v1228 = vld [vmem:[%s1 + $0x2c0] sm:$0xff]
      %v1229 = vld [vmem:[%s1 + $0x2c8] sm:$0xff]
      %v1230 = vld [vmem:[%s1 + $0x2d0] sm:$0xff]
      %v1231 = vld [vmem:[%s1 + $0x2d8] sm:$0xff]
      %v1232 = vld [vmem:[%s1 + $0x2e0] sm:$0xff]
      %v1233 = vld [vmem:[%s1 + $0x2e8] sm:$0xff]
      %v1234 = vld [vmem:[%s1 + $0x2f0] sm:$0xff]
      %v1235 = vld [vmem:[%s1 + $0x2f8] sm:$0xff]
      %v1236 = vld [vmem:[%s1 + $0x300] sm:$0xff]
      %v1237 = vld [vmem:[%s1 + $0x308] sm:$0xff]
      %v1238 = vld [vmem:[%s1 + $0x310] sm:$0xff]
      %v1239 = vld [vmem:[%s1 + $0x318] sm:$0xff]
      %v1240 = vld [vmem:[%s1 + $0x320] sm:$0xff]
      %v1241 = vld [vmem:[%s1 + $0x328] sm:$0xff]
      %v1242 = vld [vmem:[%s1 + $0x330] sm:$0xff]
      %v1243 = vld [vmem:[%s1 + $0x338] sm:$0xff]
      %v1244 = vld [vmem:[%s1 + $0x340] sm:$0xff]
      %v1245 = vld [vmem:[%s1 + $0x348] sm:$0xff]
      %v1246 = vld [vmem:[%s1 + $0x350] sm:$0xff]
      %v1247 = vld [vmem:[%s1 + $0x358] sm:$0xff]
      %v1248 = vld [vmem:[%s1 + $0x360] sm:$0xff]
      %v1249 = vld [vmem:[%s1 + $0x368] sm:$0xff]
      %v1250 = vld [vmem:[%s1 + $0x370] sm:$0xff]
      %v1251 = vld [vmem:[%s1 + $0x378] sm:$0xff]
      %v1252 = vld [vmem:[%s1 + $0x380] sm:$0xff]
      %v1253 = vld [vmem:[%s1 + $0x388] sm:$0xff]
      %v1254 = vld [vmem:[%s1 + $0x390] sm:$0xff]
      %v1255 = vld [vmem:[%s1 + $0x398] sm:$0xff]
      %v1256 = vld [vmem:[%s1 + $0x3a0] sm:$0xff]
      %v1257 = vld [vmem:[%s1 + $0x3a8] sm:$0xff]
      %v1258 = vld [vmem:[%s1 + $0x3b0] sm:$0xff]
      %v1259 = vld [vmem:[%s1 + $0x3b8] sm:$0xff]
      %v1260 = vld [vmem:[%s1 + $0x3c0] sm:$0xff]
      %v1261 = vld [vmem:[%s1 + $0x3c8] sm:$0xff]
      %v1262 = vld [vmem:[%s1 + $0x3d0] sm:$0xff]
      %v1263 = vld [vmem:[%s1 + $0x3d8] sm:$0xff]
      %v1264 = vld [vmem:[%s1 + $0x3e0] sm:$0xff]
      %v1265 = vld [vmem:[%s1 + $0x3e8] sm:$0xff]
      %v1266 = vld [vmem:[%s1 + $0x3f0] sm:$0xff]
      %v1267 = vld [vmem:[%s1 + $0x3f8] sm:$0xff]
      %v1268 = vld [vmem:[%s1 + $0x400] sm:$0xff]
      %v1269 = vld [vmem:[%s1 + $0x408] sm:$0xff]
      %v1270 = vld [vmem:[%s1 + $0x410] sm:$0xff]
      %v1271 = vld [vmem:[%s1 + $0x418] sm:$0xff]
      %v1272 = vld [vmem:[%s1 + $0x420] sm:$0xff]
      %v1273 = vld [vmem:[%s1 + $0x428] sm:$0xff]
      %v1274 = vld [vmem:[%s1 + $0x430] sm:$0xff]
      %v1275 = vld [vmem:[%s1 + $0x438] sm:$0xff]
      %v1276 = vld [vmem:[%s1 + $0x440] sm:$0xff]
      %v1277 = vld [vmem:[%s1 + $0x448] sm:$0xff]
      %v1278 = vld [vmem:[%s1 + $0x450] sm:$0xff]
      %v1279 = vld [vmem:[%s1 + $0x458] sm:$0xff]
      %v1280 = vld [vmem:[%s1 + $0x460] sm:$0xff]
      %v1281 = vld [vmem:[%s1 + $0x468] sm:$0xff]
      %v1282 = vld [vmem:[%s1 + $0x470] sm:$0xff]
      %v1283 = vld [vmem:[%s1 + $0x478] sm:$0xff]
      %v1284 = vld [vmem:[%s2] sm:$0x1]
      %v1286 = vperm.slane %v1284, 0
      %1288 = vmatpush.msra.mxu0 %v1155
      %1289 = vmatpush.msra.mxu0 %v1154
      %1290 = vmatpush.msra.mxu0 %v1153
      %1291 = vmatpush.msra.mxu0 %v1152
      %1292 = vmatpush.msra.mxu0 %v1151
      %1293 = vmatpush.msra.mxu0 %v1150
      %1294 = vmatpush.msra.mxu0 %v1149
      %1295 = vmatpush.msra.mxu0 %v1148
      %1296 = vmatpush.msra.mxu0 %v1147
      %1297 = vmatpush.msra.mxu0 %v1146
      %1298 = vmatpush.msra.mxu0 %v1145
      %1299 = vmatpush.msra.mxu0 %v1144
      %1300 = vmatpush.msra.mxu0 %v1143
      %1301 = vmatpush.msra.mxu0 %v1142
      %1302 = vmatpush.msra.mxu0 %v1141
      %1303 = vmatpush.msra.mxu0 %v1140
      %1304 = vmatmul.f32.gmra.mxu0 %v852
      %v1305 = vpop.f32.mrf.mxu0
      %v1306 = vadd.f32 %v1286, %v1305
      %1307 = vmatmul.f32.gmra.mxu0 %v861
      %v1308 = vpop.f32.mrf.mxu0
      %v1309 = vadd.f32 %v1286, %v1308
      %1310 = vmatmul.f32.gmra.mxu0 %v870
      %v1311 = vpop.f32.mrf.mxu0
      %v1312 = vadd.f32 %v1286, %v1311
      %1313 = vmatmul.f32.gmra.mxu0 %v879
      %v1314 = vpop.f32.mrf.mxu0
      %v1315 = vadd.f32 %v1286, %v1314
      %1316 = vmatmul.f32.gmra.mxu0 %v888
      %v1317 = vpop.f32.mrf.mxu0
      %v1318 = vadd.f32 %v1286, %v1317
      %1319 = vmatmul.f32.gmra.mxu0 %v897
      %v1320 = vpop.f32.mrf.mxu0
      %v1321 = vadd.f32 %v1286, %v1320
      %1322 = vmatmul.f32.gmra.mxu0 %v906
      %v1323 = vpop.f32.mrf.mxu0
      %v1324 = vadd.f32 %v1286, %v1323
      %1325 = vmatmul.f32.gmra.mxu0 %v915
      %v1326 = vpop.f32.mrf.mxu0
      %v1327 = vadd.f32 %v1286, %v1326
      %1328 = vmatmul.f32.gmra.mxu0 %v924
      %v1329 = vpop.f32.mrf.mxu0
      %v1330 = vadd.f32 %v1286, %v1329
      %1331 = vmatmul.f32.gmra.mxu0 %v933
      %v1332 = vpop.f32.mrf.mxu0
      %v1333 = vadd.f32 %v1286, %v1332
      %1334 = vmatmul.f32.gmra.mxu0 %v942
      %v1335 = vpop.f32.mrf.mxu0
      %v1336 = vadd.f32 %v1286, %v1335
      %1337 = vmatmul.f32.gmra.mxu0 %v951
      %v1338 = vpop.f32.mrf.mxu0
      %v1339 = vadd.f32 %v1286, %v1338
      %1340 = vmatmul.f32.gmra.mxu0 %v960
      %v1341 = vpop.f32.mrf.mxu0
      %v1342 = vadd.f32 %v1286, %v1341
      %1343 = vmatmul.f32.gmra.mxu0 %v969
      %v1344 = vpop.f32.mrf.mxu0
      %v1345 = vadd.f32 %v1286, %v1344
      %1346 = vmatmul.f32.gmra.mxu0 %v978
      %v1347 = vpop.f32.mrf.mxu0
      %v1348 = vadd.f32 %v1286, %v1347
      %1349 = vmatmul.f32.gmra.mxu0 %v987
      %v1350 = vpop.f32.mrf.mxu0
      %v1351 = vadd.f32 %v1286, %v1350
      %1352 = vmatmul.f32.gmra.mxu0 %v996
      %v1353 = vpop.f32.mrf.mxu0
      %v1354 = vadd.f32 %v1286, %v1353
      %1355 = vmatmul.f32.gmra.mxu0 %v1005
      %v1356 = vpop.f32.mrf.mxu0
      %v1357 = vadd.f32 %v1286, %v1356
      %1358 = vmatmul.f32.gmra.mxu0 %v1014
      %v1359 = vpop.f32.mrf.mxu0
      %v1360 = vadd.f32 %v1286, %v1359
      %1361 = vmatmul.f32.gmra.mxu0 %v1023
      %v1362 = vpop.f32.mrf.mxu0
      %v1363 = vadd.f32 %v1286, %v1362
      %1364 = vmatmul.f32.gmra.mxu0 %v1032
      %v1365 = vpop.f32.mrf.mxu0
      %v1366 = vadd.f32 %v1286, %v1365
      %1367 = vmatmul.f32.gmra.mxu0 %v1041
      %v1368 = vpop.f32.mrf.mxu0
      %v1369 = vadd.f32 %v1286, %v1368
      %1370 = vmatmul.f32.gmra.mxu0 %v1050
      %v1371 = vpop.f32.mrf.mxu0
      %v1372 = vadd.f32 %v1286, %v1371
      %1373 = vmatmul.f32.gmra.mxu0 %v1059
      %v1374 = vpop.f32.mrf.mxu0
      %v1375 = vadd.f32 %v1286, %v1374
      %1376 = vmatmul.f32.gmra.mxu0 %v1068
      %v1377 = vpop.f32.mrf.mxu0
      %v1378 = vadd.f32 %v1286, %v1377
      %1379 = vmatmul.f32.gmra.mxu0 %v1077
      %v1380 = vpop.f32.mrf.mxu0
      %v1381 = vadd.f32 %v1286, %v1380
      %1382 = vmatmul.f32.gmra.mxu0 %v1086
      %v1383 = vpop.f32.mrf.mxu0
      %v1384 = vadd.f32 %v1286, %v1383
      %1385 = vmatmul.f32.gmra.mxu0 %v1095
      %v1386 = vpop.f32.mrf.mxu0
      %v1387 = vadd.f32 %v1286, %v1386
      %1388 = vmatmul.f32.gmra.mxu0 %v1104
      %v1389 = vpop.f32.mrf.mxu0
      %v1390 = vadd.f32 %v1286, %v1389
      %1391 = vmatmul.f32.gmra.mxu0 %v1113
      %v1392 = vpop.f32.mrf.mxu0
      %v1393 = vadd.f32 %v1286, %v1392
      %1394 = vmatmul.f32.gmra.mxu0 %v1122
      %v1395 = vpop.f32.mrf.mxu0
      %v1396 = vadd.f32 %v1286, %v1395
      %1397 = vmatmul.f32.gmra.mxu0 %v1131
      %v1398 = vpop.f32.mrf.mxu0
      %v1399 = vadd.f32 %v1286, %v1398
      %1400 = vdwg.mxu0
      %1401 = vmatpush.msra.mxu0 %v1171
      %1402 = vmatpush.msra.mxu0 %v1170
      %1403 = vmatpush.msra.mxu0 %v1169
      %1404 = vmatpush.msra.mxu0 %v1168
      %1405 = vmatpush.msra.mxu0 %v1167
      %1406 = vmatpush.msra.mxu0 %v1166
      %1407 = vmatpush.msra.mxu0 %v1165
      %1408 = vmatpush.msra.mxu0 %v1164
      %1409 = vmatpush.msra.mxu0 %v1163
      %1410 = vmatpush.msra.mxu0 %v1162
      %1411 = vmatpush.msra.mxu0 %v1161
      %1412 = vmatpush.msra.mxu0 %v1160
      %1413 = vmatpush.msra.mxu0 %v1159
      %1414 = vmatpush.msra.mxu0 %v1158
      %1415 = vmatpush.msra.mxu0 %v1157
      %1416 = vmatpush.msra.mxu0 %v1156
      %1417 = vmatmul.f32.gmra.mxu0 %v853
      %v1418 = vpop.f32.mrf.mxu0
      %v1419 = vadd.f32 %v1306, %v1418
      %1420 = vmatmul.f32.gmra.mxu0 %v862
      %v1421 = vpop.f32.mrf.mxu0
      %v1422 = vadd.f32 %v1309, %v1421
      %1423 = vmatmul.f32.gmra.mxu0 %v871
      %v1424 = vpop.f32.mrf.mxu0
      %v1425 = vadd.f32 %v1312, %v1424
      %1426 = vmatmul.f32.gmra.mxu0 %v880
      %v1427 = vpop.f32.mrf.mxu0
      %v1428 = vadd.f32 %v1315, %v1427
      %1429 = vmatmul.f32.gmra.mxu0 %v889
      %v1430 = vpop.f32.mrf.mxu0
      %v1431 = vadd.f32 %v1318, %v1430
      %1432 = vmatmul.f32.gmra.mxu0 %v898
      %v1433 = vpop.f32.mrf.mxu0
      %v1434 = vadd.f32 %v1321, %v1433
      %1435 = vmatmul.f32.gmra.mxu0 %v907
      %v1436 = vpop.f32.mrf.mxu0
      %v1437 = vadd.f32 %v1324, %v1436
      %1438 = vmatmul.f32.gmra.mxu0 %v916
      %v1439 = vpop.f32.mrf.mxu0
      %v1440 = vadd.f32 %v1327, %v1439
      %1441 = vmatmul.f32.gmra.mxu0 %v925
      %v1442 = vpop.f32.mrf.mxu0
      %v1443 = vadd.f32 %v1330, %v1442
      %1444 = vmatmul.f32.gmra.mxu0 %v934
      %v1445 = vpop.f32.mrf.mxu0
      %v1446 = vadd.f32 %v1333, %v1445
      %1447 = vmatmul.f32.gmra.mxu0 %v943
      %v1448 = vpop.f32.mrf.mxu0
      %v1449 = vadd.f32 %v1336, %v1448
      %1450 = vmatmul.f32.gmra.mxu0 %v952
      %v1451 = vpop.f32.mrf.mxu0
      %v1452 = vadd.f32 %v1339, %v1451
      %1453 = vmatmul.f32.gmra.mxu0 %v961
      %v1454 = vpop.f32.mrf.mxu0
      %v1455 = vadd.f32 %v1342, %v1454
      %1456 = vmatmul.f32.gmra.mxu0 %v970
      %v1457 = vpop.f32.mrf.mxu0
      %v1458 = vadd.f32 %v1345, %v1457
      %1459 = vmatmul.f32.gmra.mxu0 %v979
      %v1460 = vpop.f32.mrf.mxu0
      %v1461 = vadd.f32 %v1348, %v1460
      %1462 = vmatmul.f32.gmra.mxu0 %v988
      %v1463 = vpop.f32.mrf.mxu0
      %v1464 = vadd.f32 %v1351, %v1463
      %1465 = vmatmul.f32.gmra.mxu0 %v997
      %v1466 = vpop.f32.mrf.mxu0
      %v1467 = vadd.f32 %v1354, %v1466
      %1468 = vmatmul.f32.gmra.mxu0 %v1006
      %v1469 = vpop.f32.mrf.mxu0
      %v1470 = vadd.f32 %v1357, %v1469
      %1471 = vmatmul.f32.gmra.mxu0 %v1015
      %v1472 = vpop.f32.mrf.mxu0
      %v1473 = vadd.f32 %v1360, %v1472
      %1474 = vmatmul.f32.gmra.mxu0 %v1024
      %v1475 = vpop.f32.mrf.mxu0
      %v1476 = vadd.f32 %v1363, %v1475
      %1477 = vmatmul.f32.gmra.mxu0 %v1033
      %v1478 = vpop.f32.mrf.mxu0
      %v1479 = vadd.f32 %v1366, %v1478
      %1480 = vmatmul.f32.gmra.mxu0 %v1042
      %v1481 = vpop.f32.mrf.mxu0
      %v1482 = vadd.f32 %v1369, %v1481
      %1483 = vmatmul.f32.gmra.mxu0 %v1051
      %v1484 = vpop.f32.mrf.mxu0
      %v1485 = vadd.f32 %v1372, %v1484
      %1486 = vmatmul.f32.gmra.mxu0 %v1060
      %v1487 = vpop.f32.mrf.mxu0
      %v1488 = vadd.f32 %v1375, %v1487
      %1489 = vmatmul.f32.gmra.mxu0 %v1069
      %v1490 = vpop.f32.mrf.mxu0
      %v1491 = vadd.f32 %v1378, %v1490
      %1492 = vmatmul.f32.gmra.mxu0 %v1078
      %v1493 = vpop.f32.mrf.mxu0
      %v1494 = vadd.f32 %v1381, %v1493
      %1495 = vmatmul.f32.gmra.mxu0 %v1087
      %v1496 = vpop.f32.mrf.mxu0
      %v1497 = vadd.f32 %v1384, %v1496
      %1498 = vmatmul.f32.gmra.mxu0 %v1096
      %v1499 = vpop.f32.mrf.mxu0
      %v1500 = vadd.f32 %v1387, %v1499
      %1501 = vmatmul.f32.gmra.mxu0 %v1105
      %v1502 = vpop.f32.mrf.mxu0
      %v1503 = vadd.f32 %v1390, %v1502
      %1504 = vmatmul.f32.gmra.mxu0 %v1114
      %v1505 = vpop.f32.mrf.mxu0
      %v1506 = vadd.f32 %v1393, %v1505
      %1507 = vmatmul.f32.gmra.mxu0 %v1123
      %v1508 = vpop.f32.mrf.mxu0
      %v1509 = vadd.f32 %v1396, %v1508
      %1510 = vmatmul.f32.gmra.mxu0 %v1132
      %v1511 = vpop.f32.mrf.mxu0
      %v1512 = vadd.f32 %v1399, %v1511
      %1513 = vdwg.mxu0
      %1514 = vmatpush.msra.mxu0 %v1187
      %1515 = vmatpush.msra.mxu0 %v1186
      %1516 = vmatpush.msra.mxu0 %v1185
      %1517 = vmatpush.msra.mxu0 %v1184
      %1518 = vmatpush.msra.mxu0 %v1183
      %1519 = vmatpush.msra.mxu0 %v1182
      %1520 = vmatpush.msra.mxu0 %v1181
      %1521 = vmatpush.msra.mxu0 %v1180
      %1522 = vmatpush.msra.mxu0 %v1179
      %1523 = vmatpush.msra.mxu0 %v1178
      %1524 = vmatpush.msra.mxu0 %v1177
      %1525 = vmatpush.msra.mxu0 %v1176
      %1526 = vmatpush.msra.mxu0 %v1175
      %1527 = vmatpush.msra.mxu0 %v1174
      %1528 = vmatpush.msra.mxu0 %v1173
      %1529 = vmatpush.msra.mxu0 %v1172
      %1530 = vmatmul.f32.gmra.mxu0 %v854
      %v1531 = vpop.f32.mrf.mxu0
      %v1532 = vadd.f32 %v1419, %v1531
      %1533 = vmatmul.f32.gmra.mxu0 %v863
      %v1534 = vpop.f32.mrf.mxu0
      %v1535 = vadd.f32 %v1422, %v1534
      %1536 = vmatmul.f32.gmra.mxu0 %v872
      %v1537 = vpop.f32.mrf.mxu0
      %v1538 = vadd.f32 %v1425, %v1537
      %1539 = vmatmul.f32.gmra.mxu0 %v881
      %v1540 = vpop.f32.mrf.mxu0
      %v1541 = vadd.f32 %v1428, %v1540
      %1542 = vmatmul.f32.gmra.mxu0 %v890
      %v1543 = vpop.f32.mrf.mxu0
      %v1544 = vadd.f32 %v1431, %v1543
      %1545 = vmatmul.f32.gmra.mxu0 %v899
      %v1546 = vpop.f32.mrf.mxu0
      %v1547 = vadd.f32 %v1434, %v1546
      %1548 = vmatmul.f32.gmra.mxu0 %v908
      %v1549 = vpop.f32.mrf.mxu0
      %v1550 = vadd.f32 %v1437, %v1549
      %1551 = vmatmul.f32.gmra.mxu0 %v917
      %v1552 = vpop.f32.mrf.mxu0
      %v1553 = vadd.f32 %v1440, %v1552
      %1554 = vmatmul.f32.gmra.mxu0 %v926
      %v1555 = vpop.f32.mrf.mxu0
      %v1556 = vadd.f32 %v1443, %v1555
      %1557 = vmatmul.f32.gmra.mxu0 %v935
      %v1558 = vpop.f32.mrf.mxu0
      %v1559 = vadd.f32 %v1446, %v1558
      %1560 = vmatmul.f32.gmra.mxu0 %v944
      %v1561 = vpop.f32.mrf.mxu0
      %v1562 = vadd.f32 %v1449, %v1561
      %1563 = vmatmul.f32.gmra.mxu0 %v953
      %v1564 = vpop.f32.mrf.mxu0
      %v1565 = vadd.f32 %v1452, %v1564
      %1566 = vmatmul.f32.gmra.mxu0 %v962
      %v1567 = vpop.f32.mrf.mxu0
      %v1568 = vadd.f32 %v1455, %v1567
      %1569 = vmatmul.f32.gmra.mxu0 %v971
      %v1570 = vpop.f32.mrf.mxu0
      %v1571 = vadd.f32 %v1458, %v1570
      %1572 = vmatmul.f32.gmra.mxu0 %v980
      %v1573 = vpop.f32.mrf.mxu0
      %v1574 = vadd.f32 %v1461, %v1573
      %1575 = vmatmul.f32.gmra.mxu0 %v989
      %v1576 = vpop.f32.mrf.mxu0
      %v1577 = vadd.f32 %v1464, %v1576
      %1578 = vmatmul.f32.gmra.mxu0 %v998
      %v1579 = vpop.f32.mrf.mxu0
      %v1580 = vadd.f32 %v1467, %v1579
      %1581 = vmatmul.f32.gmra.mxu0 %v1007
      %v1582 = vpop.f32.mrf.mxu0
      %v1583 = vadd.f32 %v1470, %v1582
      %1584 = vmatmul.f32.gmra.mxu0 %v1016
      %v1585 = vpop.f32.mrf.mxu0
      %v1586 = vadd.f32 %v1473, %v1585
      %1587 = vmatmul.f32.gmra.mxu0 %v1025
      %v1588 = vpop.f32.mrf.mxu0
      %v1589 = vadd.f32 %v1476, %v1588
      %1590 = vmatmul.f32.gmra.mxu0 %v1034
      %v1591 = vpop.f32.mrf.mxu0
      %v1592 = vadd.f32 %v1479, %v1591
      %1593 = vmatmul.f32.gmra.mxu0 %v1043
      %v1594 = vpop.f32.mrf.mxu0
      %v1595 = vadd.f32 %v1482, %v1594
      %1596 = vmatmul.f32.gmra.mxu0 %v1052
      %v1597 = vpop.f32.mrf.mxu0
      %v1598 = vadd.f32 %v1485, %v1597
      %1599 = vmatmul.f32.gmra.mxu0 %v1061
      %v1600 = vpop.f32.mrf.mxu0
      %v1601 = vadd.f32 %v1488, %v1600
      %1602 = vmatmul.f32.gmra.mxu0 %v1070
      %v1603 = vpop.f32.mrf.mxu0
      %v1604 = vadd.f32 %v1491, %v1603
      %1605 = vmatmul.f32.gmra.mxu0 %v1079
      %v1606 = vpop.f32.mrf.mxu0
      %v1607 = vadd.f32 %v1494, %v1606
      %1608 = vmatmul.f32.gmra.mxu0 %v1088
      %v1609 = vpop.f32.mrf.mxu0
      %v1610 = vadd.f32 %v1497, %v1609
      %1611 = vmatmul.f32.gmra.mxu0 %v1097
      %v1612 = vpop.f32.mrf.mxu0
      %v1613 = vadd.f32 %v1500, %v1612
      %1614 = vmatmul.f32.gmra.mxu0 %v1106
      %v1615 = vpop.f32.mrf.mxu0
      %v1616 = vadd.f32 %v1503, %v1615
      %1617 = vmatmul.f32.gmra.mxu0 %v1115
      %v1618 = vpop.f32.mrf.mxu0
      %v1619 = vadd.f32 %v1506, %v1618
      %1620 = vmatmul.f32.gmra.mxu0 %v1124
      %v1621 = vpop.f32.mrf.mxu0
      %v1622 = vadd.f32 %v1509, %v1621
      %1623 = vmatmul.f32.gmra.mxu0 %v1133
      %v1624 = vpop.f32.mrf.mxu0
      %v1625 = vadd.f32 %v1512, %v1624
      %1626 = vdwg.mxu0
      %1627 = vmatpush.msra.mxu0 %v1203
      %1628 = vmatpush.msra.mxu0 %v1202
      %1629 = vmatpush.msra.mxu0 %v1201
      %1630 = vmatpush.msra.mxu0 %v1200
      %1631 = vmatpush.msra.mxu0 %v1199
      %1632 = vmatpush.msra.mxu0 %v1198
      %1633 = vmatpush.msra.mxu0 %v1197
      %1634 = vmatpush.msra.mxu0 %v1196
      %1635 = vmatpush.msra.mxu0 %v1195
      %1636 = vmatpush.msra.mxu0 %v1194
      %1637 = vmatpush.msra.mxu0 %v1193
      %1638 = vmatpush.msra.mxu0 %v1192
      %1639 = vmatpush.msra.mxu0 %v1191
      %1640 = vmatpush.msra.mxu0 %v1190
      %1641 = vmatpush.msra.mxu0 %v1189
      %1642 = vmatpush.msra.mxu0 %v1188
      %1643 = vmatmul.f32.gmra.mxu0 %v855
      %v1644 = vpop.f32.mrf.mxu0
      %v1645 = vadd.f32 %v1532, %v1644
      %1646 = vmatmul.f32.gmra.mxu0 %v864
      %v1647 = vpop.f32.mrf.mxu0
      %v1648 = vadd.f32 %v1535, %v1647
      %1649 = vmatmul.f32.gmra.mxu0 %v873
      %v1650 = vpop.f32.mrf.mxu0
      %v1651 = vadd.f32 %v1538, %v1650
      %1652 = vmatmul.f32.gmra.mxu0 %v882
      %v1653 = vpop.f32.mrf.mxu0
      %v1654 = vadd.f32 %v1541, %v1653
      %1655 = vmatmul.f32.gmra.mxu0 %v891
      %v1656 = vpop.f32.mrf.mxu0
      %v1657 = vadd.f32 %v1544, %v1656
      %1658 = vmatmul.f32.gmra.mxu0 %v900
      %v1659 = vpop.f32.mrf.mxu0
      %v1660 = vadd.f32 %v1547, %v1659
      %1661 = vmatmul.f32.gmra.mxu0 %v909
      %v1662 = vpop.f32.mrf.mxu0
      %v1663 = vadd.f32 %v1550, %v1662
      %1664 = vmatmul.f32.gmra.mxu0 %v918
      %v1665 = vpop.f32.mrf.mxu0
      %v1666 = vadd.f32 %v1553, %v1665
      %1667 = vmatmul.f32.gmra.mxu0 %v927
      %v1668 = vpop.f32.mrf.mxu0
      %v1669 = vadd.f32 %v1556, %v1668
      %1670 = vmatmul.f32.gmra.mxu0 %v936
      %v1671 = vpop.f32.mrf.mxu0
      %v1672 = vadd.f32 %v1559, %v1671
      %1673 = vmatmul.f32.gmra.mxu0 %v945
      %v1674 = vpop.f32.mrf.mxu0
      %v1675 = vadd.f32 %v1562, %v1674
      %1676 = vmatmul.f32.gmra.mxu0 %v954
      %v1677 = vpop.f32.mrf.mxu0
      %v1678 = vadd.f32 %v1565, %v1677
      %1679 = vmatmul.f32.gmra.mxu0 %v963
      %v1680 = vpop.f32.mrf.mxu0
      %v1681 = vadd.f32 %v1568, %v1680
      %1682 = vmatmul.f32.gmra.mxu0 %v972
      %v1683 = vpop.f32.mrf.mxu0
      %v1684 = vadd.f32 %v1571, %v1683
      %1685 = vmatmul.f32.gmra.mxu0 %v981
      %v1686 = vpop.f32.mrf.mxu0
      %v1687 = vadd.f32 %v1574, %v1686
      %1688 = vmatmul.f32.gmra.mxu0 %v990
      %v1689 = vpop.f32.mrf.mxu0
      %v1690 = vadd.f32 %v1577, %v1689
      %1691 = vmatmul.f32.gmra.mxu0 %v999
      %v1692 = vpop.f32.mrf.mxu0
      %v1693 = vadd.f32 %v1580, %v1692
      %1694 = vmatmul.f32.gmra.mxu0 %v1008
      %v1695 = vpop.f32.mrf.mxu0
      %v1696 = vadd.f32 %v1583, %v1695
      %1697 = vmatmul.f32.gmra.mxu0 %v1017
      %v1698 = vpop.f32.mrf.mxu0
      %v1699 = vadd.f32 %v1586, %v1698
      %1700 = vmatmul.f32.gmra.mxu0 %v1026
      %v1701 = vpop.f32.mrf.mxu0
      %v1702 = vadd.f32 %v1589, %v1701
      %1703 = vmatmul.f32.gmra.mxu0 %v1035
      %v1704 = vpop.f32.mrf.mxu0
      %v1705 = vadd.f32 %v1592, %v1704
      %1706 = vmatmul.f32.gmra.mxu0 %v1044
      %v1707 = vpop.f32.mrf.mxu0
      %v1708 = vadd.f32 %v1595, %v1707
      %1709 = vmatmul.f32.gmra.mxu0 %v1053
      %v1710 = vpop.f32.mrf.mxu0
      %v1711 = vadd.f32 %v1598, %v1710
      %1712 = vmatmul.f32.gmra.mxu0 %v1062
      %v1713 = vpop.f32.mrf.mxu0
      %v1714 = vadd.f32 %v1601, %v1713
      %1715 = vmatmul.f32.gmra.mxu0 %v1071
      %v1716 = vpop.f32.mrf.mxu0
      %v1717 = vadd.f32 %v1604, %v1716
      %1718 = vmatmul.f32.gmra.mxu0 %v1080
      %v1719 = vpop.f32.mrf.mxu0
      %v1720 = vadd.f32 %v1607, %v1719
      %1721 = vmatmul.f32.gmra.mxu0 %v1089
      %v1722 = vpop.f32.mrf.mxu0
      %v1723 = vadd.f32 %v1610, %v1722
      %1724 = vmatmul.f32.gmra.mxu0 %v1098
      %v1725 = vpop.f32.mrf.mxu0
      %v1726 = vadd.f32 %v1613, %v1725
      %1727 = vmatmul.f32.gmra.mxu0 %v1107
      %v1728 = vpop.f32.mrf.mxu0
      %v1729 = vadd.f32 %v1616, %v1728
      %1730 = vmatmul.f32.gmra.mxu0 %v1116
      %v1731 = vpop.f32.mrf.mxu0
      %v1732 = vadd.f32 %v1619, %v1731
      %1733 = vmatmul.f32.gmra.mxu0 %v1125
      %v1734 = vpop.f32.mrf.mxu0
      %v1735 = vadd.f32 %v1622, %v1734
      %1736 = vmatmul.f32.gmra.mxu0 %v1134
      %v1737 = vpop.f32.mrf.mxu0
      %v1738 = vadd.f32 %v1625, %v1737
      %1739 = vdwg.mxu0
      %1740 = vmatpush.msra.mxu0 %v1219
      %1741 = vmatpush.msra.mxu0 %v1218
      %1742 = vmatpush.msra.mxu0 %v1217
      %1743 = vmatpush.msra.mxu0 %v1216
      %1744 = vmatpush.msra.mxu0 %v1215
      %1745 = vmatpush.msra.mxu0 %v1214
      %1746 = vmatpush.msra.mxu0 %v1213
      %1747 = vmatpush.msra.mxu0 %v1212
      %1748 = vmatpush.msra.mxu0 %v1211
      %1749 = vmatpush.msra.mxu0 %v1210
      %1750 = vmatpush.msra.mxu0 %v1209
      %1751 = vmatpush.msra.mxu0 %v1208
      %1752 = vmatpush.msra.mxu0 %v1207
      %1753 = vmatpush.msra.mxu0 %v1206
      %1754 = vmatpush.msra.mxu0 %v1205
      %1755 = vmatpush.msra.mxu0 %v1204
      %1756 = vmatmul.f32.gmra.mxu0 %v856
      %v1757 = vpop.f32.mrf.mxu0
      %v1758 = vadd.f32 %v1645, %v1757
      %1759 = vmatmul.f32.gmra.mxu0 %v865
      %v1760 = vpop.f32.mrf.mxu0
      %v1761 = vadd.f32 %v1648, %v1760
      %1762 = vmatmul.f32.gmra.mxu0 %v874
      %v1763 = vpop.f32.mrf.mxu0
      %v1764 = vadd.f32 %v1651, %v1763
      %1765 = vmatmul.f32.gmra.mxu0 %v883
      %v1766 = vpop.f32.mrf.mxu0
      %v1767 = vadd.f32 %v1654, %v1766
      %1768 = vmatmul.f32.gmra.mxu0 %v892
      %v1769 = vpop.f32.mrf.mxu0
      %v1770 = vadd.f32 %v1657, %v1769
      %1771 = vmatmul.f32.gmra.mxu0 %v901
      %v1772 = vpop.f32.mrf.mxu0
      %v1773 = vadd.f32 %v1660, %v1772
      %1774 = vmatmul.f32.gmra.mxu0 %v910
      %v1775 = vpop.f32.mrf.mxu0
      %v1776 = vadd.f32 %v1663, %v1775
      %1777 = vmatmul.f32.gmra.mxu0 %v919
      %v1778 = vpop.f32.mrf.mxu0
      %v1779 = vadd.f32 %v1666, %v1778
      %1780 = vmatmul.f32.gmra.mxu0 %v928
      %v1781 = vpop.f32.mrf.mxu0
      %v1782 = vadd.f32 %v1669, %v1781
      %1783 = vmatmul.f32.gmra.mxu0 %v937
      %v1784 = vpop.f32.mrf.mxu0
      %v1785 = vadd.f32 %v1672, %v1784
      %1786 = vmatmul.f32.gmra.mxu0 %v946
      %v1787 = vpop.f32.mrf.mxu0
      %v1788 = vadd.f32 %v1675, %v1787
      %1789 = vmatmul.f32.gmra.mxu0 %v955
      %v1790 = vpop.f32.mrf.mxu0
      %v1791 = vadd.f32 %v1678, %v1790
      %1792 = vmatmul.f32.gmra.mxu0 %v964
      %v1793 = vpop.f32.mrf.mxu0
      %v1794 = vadd.f32 %v1681, %v1793
      %1795 = vmatmul.f32.gmra.mxu0 %v973
      %v1796 = vpop.f32.mrf.mxu0
      %v1797 = vadd.f32 %v1684, %v1796
      %1798 = vmatmul.f32.gmra.mxu0 %v982
      %v1799 = vpop.f32.mrf.mxu0
      %v1800 = vadd.f32 %v1687, %v1799
      %1801 = vmatmul.f32.gmra.mxu0 %v991
      %v1802 = vpop.f32.mrf.mxu0
      %v1803 = vadd.f32 %v1690, %v1802
      %1804 = vmatmul.f32.gmra.mxu0 %v1000
      %v1805 = vpop.f32.mrf.mxu0
      %v1806 = vadd.f32 %v1693, %v1805
      %1807 = vmatmul.f32.gmra.mxu0 %v1009
      %v1808 = vpop.f32.mrf.mxu0
      %v1809 = vadd.f32 %v1696, %v1808
      %1810 = vmatmul.f32.gmra.mxu0 %v1018
      %v1811 = vpop.f32.mrf.mxu0
      %v1812 = vadd.f32 %v1699, %v1811
      %1813 = vmatmul.f32.gmra.mxu0 %v1027
      %v1814 = vpop.f32.mrf.mxu0
      %v1815 = vadd.f32 %v1702, %v1814
      %1816 = vmatmul.f32.gmra.mxu0 %v1036
      %v1817 = vpop.f32.mrf.mxu0
      %v1818 = vadd.f32 %v1705, %v1817
      %1819 = vmatmul.f32.gmra.mxu0 %v1045
      %v1820 = vpop.f32.mrf.mxu0
      %v1821 = vadd.f32 %v1708, %v1820
      %1822 = vmatmul.f32.gmra.mxu0 %v1054
      %v1823 = vpop.f32.mrf.mxu0
      %v1824 = vadd.f32 %v1711, %v1823
      %1825 = vmatmul.f32.gmra.mxu0 %v1063
      %v1826 = vpop.f32.mrf.mxu0
      %v1827 = vadd.f32 %v1714, %v1826
      %1828 = vmatmul.f32.gmra.mxu0 %v1072
      %v1829 = vpop.f32.mrf.mxu0
      %v1830 = vadd.f32 %v1717, %v1829
      %1831 = vmatmul.f32.gmra.mxu0 %v1081
      %v1832 = vpop.f32.mrf.mxu0
      %v1833 = vadd.f32 %v1720, %v1832
      %1834 = vmatmul.f32.gmra.mxu0 %v1090
      %v1835 = vpop.f32.mrf.mxu0
      %v1836 = vadd.f32 %v1723, %v1835
      %1837 = vmatmul.f32.gmra.mxu0 %v1099
      %v1838 = vpop.f32.mrf.mxu0
      %v1839 = vadd.f32 %v1726, %v1838
      %1840 = vmatmul.f32.gmra.mxu0 %v1108
      %v1841 = vpop.f32.mrf.mxu0
      %v1842 = vadd.f32 %v1729, %v1841
      %1843 = vmatmul.f32.gmra.mxu0 %v1117
      %v1844 = vpop.f32.mrf.mxu0
      %v1845 = vadd.f32 %v1732, %v1844
      %1846 = vmatmul.f32.gmra.mxu0 %v1126
      %v1847 = vpop.f32.mrf.mxu0
      %v1848 = vadd.f32 %v1735, %v1847
      %1849 = vmatmul.f32.gmra.mxu0 %v1135
      %v1850 = vpop.f32.mrf.mxu0
      %v1851 = vadd.f32 %v1738, %v1850
      %1852 = vdwg.mxu0
      %1853 = vmatpush.msra.mxu0 %v1235
      %1854 = vmatpush.msra.mxu0 %v1234
      %1855 = vmatpush.msra.mxu0 %v1233
      %1856 = vmatpush.msra.mxu0 %v1232
      %1857 = vmatpush.msra.mxu0 %v1231
      %1858 = vmatpush.msra.mxu0 %v1230
      %1859 = vmatpush.msra.mxu0 %v1229
      %1860 = vmatpush.msra.mxu0 %v1228
      %1861 = vmatpush.msra.mxu0 %v1227
      %1862 = vmatpush.msra.mxu0 %v1226
      %1863 = vmatpush.msra.mxu0 %v1225
      %1864 = vmatpush.msra.mxu0 %v1224
      %1865 = vmatpush.msra.mxu0 %v1223
      %1866 = vmatpush.msra.mxu0 %v1222
      %1867 = vmatpush.msra.mxu0 %v1221
      %1868 = vmatpush.msra.mxu0 %v1220
      %1869 = vmatmul.f32.gmra.mxu0 %v857
      %v1870 = vpop.f32.mrf.mxu0
      %v1871 = vadd.f32 %v1758, %v1870
      %1872 = vmatmul.f32.gmra.mxu0 %v866
      %v1873 = vpop.f32.mrf.mxu0
      %v1874 = vadd.f32 %v1761, %v1873
      %1875 = vmatmul.f32.gmra.mxu0 %v875
      %v1876 = vpop.f32.mrf.mxu0
      %v1877 = vadd.f32 %v1764, %v1876
      %1878 = vmatmul.f32.gmra.mxu0 %v884
      %v1879 = vpop.f32.mrf.mxu0
      %v1880 = vadd.f32 %v1767, %v1879
      %1881 = vmatmul.f32.gmra.mxu0 %v893
      %v1882 = vpop.f32.mrf.mxu0
      %v1883 = vadd.f32 %v1770, %v1882
      %1884 = vmatmul.f32.gmra.mxu0 %v902
      %v1885 = vpop.f32.mrf.mxu0
      %v1886 = vadd.f32 %v1773, %v1885
      %1887 = vmatmul.f32.gmra.mxu0 %v911
      %v1888 = vpop.f32.mrf.mxu0
      %v1889 = vadd.f32 %v1776, %v1888
      %1890 = vmatmul.f32.gmra.mxu0 %v920
      %v1891 = vpop.f32.mrf.mxu0
      %v1892 = vadd.f32 %v1779, %v1891
      %1893 = vmatmul.f32.gmra.mxu0 %v929
      %v1894 = vpop.f32.mrf.mxu0
      %v1895 = vadd.f32 %v1782, %v1894
      %1896 = vmatmul.f32.gmra.mxu0 %v938
      %v1897 = vpop.f32.mrf.mxu0
      %v1898 = vadd.f32 %v1785, %v1897
      %1899 = vmatmul.f32.gmra.mxu0 %v947
      %v1900 = vpop.f32.mrf.mxu0
      %v1901 = vadd.f32 %v1788, %v1900
      %1902 = vmatmul.f32.gmra.mxu0 %v956
      %v1903 = vpop.f32.mrf.mxu0
      %v1904 = vadd.f32 %v1791, %v1903
      %1905 = vmatmul.f32.gmra.mxu0 %v965
      %v1906 = vpop.f32.mrf.mxu0
      %v1907 = vadd.f32 %v1794, %v1906
      %1908 = vmatmul.f32.gmra.mxu0 %v974
      %v1909 = vpop.f32.mrf.mxu0
      %v1910 = vadd.f32 %v1797, %v1909
      %1911 = vmatmul.f32.gmra.mxu0 %v983
      %v1912 = vpop.f32.mrf.mxu0
      %v1913 = vadd.f32 %v1800, %v1912
      %1914 = vmatmul.f32.gmra.mxu0 %v992
      %v1915 = vpop.f32.mrf.mxu0
      %v1916 = vadd.f32 %v1803, %v1915
      %1917 = vmatmul.f32.gmra.mxu0 %v1001
      %v1918 = vpop.f32.mrf.mxu0
      %v1919 = vadd.f32 %v1806, %v1918
      %1920 = vmatmul.f32.gmra.mxu0 %v1010
      %v1921 = vpop.f32.mrf.mxu0
      %v1922 = vadd.f32 %v1809, %v1921
      %1923 = vmatmul.f32.gmra.mxu0 %v1019
      %v1924 = vpop.f32.mrf.mxu0
      %v1925 = vadd.f32 %v1812, %v1924
      %1926 = vmatmul.f32.gmra.mxu0 %v1028
      %v1927 = vpop.f32.mrf.mxu0
      %v1928 = vadd.f32 %v1815, %v1927
      %1929 = vmatmul.f32.gmra.mxu0 %v1037
      %v1930 = vpop.f32.mrf.mxu0
      %v1931 = vadd.f32 %v1818, %v1930
      %1932 = vmatmul.f32.gmra.mxu0 %v1046
      %v1933 = vpop.f32.mrf.mxu0
      %v1934 = vadd.f32 %v1821, %v1933
      %1935 = vmatmul.f32.gmra.mxu0 %v1055
      %v1936 = vpop.f32.mrf.mxu0
      %v1937 = vadd.f32 %v1824, %v1936
      %1938 = vmatmul.f32.gmra.mxu0 %v1064
      %v1939 = vpop.f32.mrf.mxu0
      %v1940 = vadd.f32 %v1827, %v1939
      %1941 = vmatmul.f32.gmra.mxu0 %v1073
      %v1942 = vpop.f32.mrf.mxu0
      %v1943 = vadd.f32 %v1830, %v1942
      %1944 = vmatmul.f32.gmra.mxu0 %v1082
      %v1945 = vpop.f32.mrf.mxu0
      %v1946 = vadd.f32 %v1833, %v1945
      %1947 = vmatmul.f32.gmra.mxu0 %v1091
      %v1948 = vpop.f32.mrf.mxu0
      %v1949 = vadd.f32 %v1836, %v1948
      %1950 = vmatmul.f32.gmra.mxu0 %v1100
      %v1951 = vpop.f32.mrf.mxu0
      %v1952 = vadd.f32 %v1839, %v1951
      %1953 = vmatmul.f32.gmra.mxu0 %v1109
      %v1954 = vpop.f32.mrf.mxu0
      %v1955 = vadd.f32 %v1842, %v1954
      %1956 = vmatmul.f32.gmra.mxu0 %v1118
      %v1957 = vpop.f32.mrf.mxu0
      %v1958 = vadd.f32 %v1845, %v1957
      %1959 = vmatmul.f32.gmra.mxu0 %v1127
      %v1960 = vpop.f32.mrf.mxu0
      %v1961 = vadd.f32 %v1848, %v1960
      %1962 = vmatmul.f32.gmra.mxu0 %v1136
      %v1963 = vpop.f32.mrf.mxu0
      %v1964 = vadd.f32 %v1851, %v1963
      %1965 = vdwg.mxu0
      %1966 = vmatpush.msra.mxu0 %v1251
      %1967 = vmatpush.msra.mxu0 %v1250
      %1968 = vmatpush.msra.mxu0 %v1249
      %1969 = vmatpush.msra.mxu0 %v1248
      %1970 = vmatpush.msra.mxu0 %v1247
      %1971 = vmatpush.msra.mxu0 %v1246
      %1972 = vmatpush.msra.mxu0 %v1245
      %1973 = vmatpush.msra.mxu0 %v1244
      %1974 = vmatpush.msra.mxu0 %v1243
      %1975 = vmatpush.msra.mxu0 %v1242
      %1976 = vmatpush.msra.mxu0 %v1241
      %1977 = vmatpush.msra.mxu0 %v1240
      %1978 = vmatpush.msra.mxu0 %v1239
      %1979 = vmatpush.msra.mxu0 %v1238
      %1980 = vmatpush.msra.mxu0 %v1237
      %1981 = vmatpush.msra.mxu0 %v1236
      %1982 = vmatmul.f32.gmra.mxu0 %v858
      %v1983 = vpop.f32.mrf.mxu0
      %v1984 = vadd.f32 %v1871, %v1983
      %1985 = vmatmul.f32.gmra.mxu0 %v867
      %v1986 = vpop.f32.mrf.mxu0
      %v1987 = vadd.f32 %v1874, %v1986
      %1988 = vmatmul.f32.gmra.mxu0 %v876
      %v1989 = vpop.f32.mrf.mxu0
      %v1990 = vadd.f32 %v1877, %v1989
      %1991 = vmatmul.f32.gmra.mxu0 %v885
      %v1992 = vpop.f32.mrf.mxu0
      %v1993 = vadd.f32 %v1880, %v1992
      %1994 = vmatmul.f32.gmra.mxu0 %v894
      %v1995 = vpop.f32.mrf.mxu0
      %v1996 = vadd.f32 %v1883, %v1995
      %1997 = vmatmul.f32.gmra.mxu0 %v903
      %v1998 = vpop.f32.mrf.mxu0
      %v1999 = vadd.f32 %v1886, %v1998
      %2000 = vmatmul.f32.gmra.mxu0 %v912
      %v2001 = vpop.f32.mrf.mxu0
      %v2002 = vadd.f32 %v1889, %v2001
      %2003 = vmatmul.f32.gmra.mxu0 %v921
      %v2004 = vpop.f32.mrf.mxu0
      %v2005 = vadd.f32 %v1892, %v2004
      %2006 = vmatmul.f32.gmra.mxu0 %v930
      %v2007 = vpop.f32.mrf.mxu0
      %v2008 = vadd.f32 %v1895, %v2007
      %2009 = vmatmul.f32.gmra.mxu0 %v939
      %v2010 = vpop.f32.mrf.mxu0
      %v2011 = vadd.f32 %v1898, %v2010
      %2012 = vmatmul.f32.gmra.mxu0 %v948
      %v2013 = vpop.f32.mrf.mxu0
      %v2014 = vadd.f32 %v1901, %v2013
      %2015 = vmatmul.f32.gmra.mxu0 %v957
      %v2016 = vpop.f32.mrf.mxu0
      %v2017 = vadd.f32 %v1904, %v2016
      %2018 = vmatmul.f32.gmra.mxu0 %v966
      %v2019 = vpop.f32.mrf.mxu0
      %v2020 = vadd.f32 %v1907, %v2019
      %2021 = vmatmul.f32.gmra.mxu0 %v975
      %v2022 = vpop.f32.mrf.mxu0
      %v2023 = vadd.f32 %v1910, %v2022
      %2024 = vmatmul.f32.gmra.mxu0 %v984
      %v2025 = vpop.f32.mrf.mxu0
      %v2026 = vadd.f32 %v1913, %v2025
      %2027 = vmatmul.f32.gmra.mxu0 %v993
      %v2028 = vpop.f32.mrf.mxu0
      %v2029 = vadd.f32 %v1916, %v2028
      %2030 = vmatmul.f32.gmra.mxu0 %v1002
      %v2031 = vpop.f32.mrf.mxu0
      %v2032 = vadd.f32 %v1919, %v2031
      %2033 = vmatmul.f32.gmra.mxu0 %v1011
      %v2034 = vpop.f32.mrf.mxu0
      %v2035 = vadd.f32 %v1922, %v2034
      %2036 = vmatmul.f32.gmra.mxu0 %v1020
      %v2037 = vpop.f32.mrf.mxu0
      %v2038 = vadd.f32 %v1925, %v2037
      %2039 = vmatmul.f32.gmra.mxu0 %v1029
      %v2040 = vpop.f32.mrf.mxu0
      %v2041 = vadd.f32 %v1928, %v2040
      %2042 = vmatmul.f32.gmra.mxu0 %v1038
      %v2043 = vpop.f32.mrf.mxu0
      %v2044 = vadd.f32 %v1931, %v2043
      %2045 = vmatmul.f32.gmra.mxu0 %v1047
      %v2046 = vpop.f32.mrf.mxu0
      %v2047 = vadd.f32 %v1934, %v2046
      %2048 = vmatmul.f32.gmra.mxu0 %v1056
      %v2049 = vpop.f32.mrf.mxu0
      %v2050 = vadd.f32 %v1937, %v2049
      %2051 = vmatmul.f32.gmra.mxu0 %v1065
      %v2052 = vpop.f32.mrf.mxu0
      %v2053 = vadd.f32 %v1940, %v2052
      %2054 = vmatmul.f32.gmra.mxu0 %v1074
      %v2055 = vpop.f32.mrf.mxu0
      %v2056 = vadd.f32 %v1943, %v2055
      %2057 = vmatmul.f32.gmra.mxu0 %v1083
      %v2058 = vpop.f32.mrf.mxu0
      %v2059 = vadd.f32 %v1946, %v2058
      %2060 = vmatmul.f32.gmra.mxu0 %v1092
      %v2061 = vpop.f32.mrf.mxu0
      %v2062 = vadd.f32 %v1949, %v2061
      %2063 = vmatmul.f32.gmra.mxu0 %v1101
      %v2064 = vpop.f32.mrf.mxu0
      %v2065 = vadd.f32 %v1952, %v2064
      %2066 = vmatmul.f32.gmra.mxu0 %v1110
      %v2067 = vpop.f32.mrf.mxu0
      %v2068 = vadd.f32 %v1955, %v2067
      %2069 = vmatmul.f32.gmra.mxu0 %v1119
      %v2070 = vpop.f32.mrf.mxu0
      %v2071 = vadd.f32 %v1958, %v2070
      %2072 = vmatmul.f32.gmra.mxu0 %v1128
      %v2073 = vpop.f32.mrf.mxu0
      %v2074 = vadd.f32 %v1961, %v2073
      %2075 = vmatmul.f32.gmra.mxu0 %v1137
      %v2076 = vpop.f32.mrf.mxu0
      %v2077 = vadd.f32 %v1964, %v2076
      %2078 = vdwg.mxu0
      %2079 = vmatpush.msra.mxu0 %v1267
      %2080 = vmatpush.msra.mxu0 %v1266
      %2081 = vmatpush.msra.mxu0 %v1265
      %2082 = vmatpush.msra.mxu0 %v1264
      %2083 = vmatpush.msra.mxu0 %v1263
      %2084 = vmatpush.msra.mxu0 %v1262
      %2085 = vmatpush.msra.mxu0 %v1261
      %2086 = vmatpush.msra.mxu0 %v1260
      %2087 = vmatpush.msra.mxu0 %v1259
      %2088 = vmatpush.msra.mxu0 %v1258
      %2089 = vmatpush.msra.mxu0 %v1257
      %2090 = vmatpush.msra.mxu0 %v1256
      %2091 = vmatpush.msra.mxu0 %v1255
      %2092 = vmatpush.msra.mxu0 %v1254
      %2093 = vmatpush.msra.mxu0 %v1253
      %2094 = vmatpush.msra.mxu0 %v1252
      %2095 = vmatmul.f32.gmra.mxu0 %v859
      %v2096 = vpop.f32.mrf.mxu0
      %v2097 = vadd.f32 %v1984, %v2096
      %2098 = vmatmul.f32.gmra.mxu0 %v868
      %v2099 = vpop.f32.mrf.mxu0
      %v2100 = vadd.f32 %v1987, %v2099
      %2101 = vmatmul.f32.gmra.mxu0 %v877
      %v2102 = vpop.f32.mrf.mxu0
      %v2103 = vadd.f32 %v1990, %v2102
      %2104 = vmatmul.f32.gmra.mxu0 %v886
      %v2105 = vpop.f32.mrf.mxu0
      %v2106 = vadd.f32 %v1993, %v2105
      %2107 = vmatmul.f32.gmra.mxu0 %v895
      %v2108 = vpop.f32.mrf.mxu0
      %v2109 = vadd.f32 %v1996, %v2108
      %2110 = vmatmul.f32.gmra.mxu0 %v904
      %v2111 = vpop.f32.mrf.mxu0
      %v2112 = vadd.f32 %v1999, %v2111
      %2113 = vmatmul.f32.gmra.mxu0 %v913
      %v2114 = vpop.f32.mrf.mxu0
      %v2115 = vadd.f32 %v2002, %v2114
      %2116 = vmatmul.f32.gmra.mxu0 %v922
      %v2117 = vpop.f32.mrf.mxu0
      %v2118 = vadd.f32 %v2005, %v2117
      %2119 = vmatmul.f32.gmra.mxu0 %v931
      %v2120 = vpop.f32.mrf.mxu0
      %v2121 = vadd.f32 %v2008, %v2120
      %2122 = vmatmul.f32.gmra.mxu0 %v940
      %v2123 = vpop.f32.mrf.mxu0
      %v2124 = vadd.f32 %v2011, %v2123
      %2125 = vmatmul.f32.gmra.mxu0 %v949
      %v2126 = vpop.f32.mrf.mxu0
      %v2127 = vadd.f32 %v2014, %v2126
      %2128 = vmatmul.f32.gmra.mxu0 %v958
      %v2129 = vpop.f32.mrf.mxu0
      %v2130 = vadd.f32 %v2017, %v2129
      %2131 = vmatmul.f32.gmra.mxu0 %v967
      %v2132 = vpop.f32.mrf.mxu0
      %v2133 = vadd.f32 %v2020, %v2132
      %2134 = vmatmul.f32.gmra.mxu0 %v976
      %v2135 = vpop.f32.mrf.mxu0
      %v2136 = vadd.f32 %v2023, %v2135
      %2137 = vmatmul.f32.gmra.mxu0 %v985
      %v2138 = vpop.f32.mrf.mxu0
      %v2139 = vadd.f32 %v2026, %v2138
      %2140 = vmatmul.f32.gmra.mxu0 %v994
      %v2141 = vpop.f32.mrf.mxu0
      %v2142 = vadd.f32 %v2029, %v2141
      %2143 = vmatmul.f32.gmra.mxu0 %v1003
      %v2144 = vpop.f32.mrf.mxu0
      %v2145 = vadd.f32 %v2032, %v2144
      %2146 = vmatmul.f32.gmra.mxu0 %v1012
      %v2147 = vpop.f32.mrf.mxu0
      %v2148 = vadd.f32 %v2035, %v2147
      %2149 = vmatmul.f32.gmra.mxu0 %v1021
      %v2150 = vpop.f32.mrf.mxu0
      %v2151 = vadd.f32 %v2038, %v2150
      %2152 = vmatmul.f32.gmra.mxu0 %v1030
      %v2153 = vpop.f32.mrf.mxu0
      %v2154 = vadd.f32 %v2041, %v2153
      %2155 = vmatmul.f32.gmra.mxu0 %v1039
      %v2156 = vpop.f32.mrf.mxu0
      %v2157 = vadd.f32 %v2044, %v2156
      %2158 = vmatmul.f32.gmra.mxu0 %v1048
      %v2159 = vpop.f32.mrf.mxu0
      %v2160 = vadd.f32 %v2047, %v2159
      %2161 = vmatmul.f32.gmra.mxu0 %v1057
      %v2162 = vpop.f32.mrf.mxu0
      %v2163 = vadd.f32 %v2050, %v2162
      %2164 = vmatmul.f32.gmra.mxu0 %v1066
      %v2165 = vpop.f32.mrf.mxu0
      %v2166 = vadd.f32 %v2053, %v2165
      %2167 = vmatmul.f32.gmra.mxu0 %v1075
      %v2168 = vpop.f32.mrf.mxu0
      %v2169 = vadd.f32 %v2056, %v2168
      %2170 = vmatmul.f32.gmra.mxu0 %v1084
      %v2171 = vpop.f32.mrf.mxu0
      %v2172 = vadd.f32 %v2059, %v2171
      %2173 = vmatmul.f32.gmra.mxu0 %v1093
      %v2174 = vpop.f32.mrf.mxu0
      %v2175 = vadd.f32 %v2062, %v2174
      %2176 = vmatmul.f32.gmra.mxu0 %v1102
      %v2177 = vpop.f32.mrf.mxu0
      %v2178 = vadd.f32 %v2065, %v2177
      %2179 = vmatmul.f32.gmra.mxu0 %v1111
      %v2180 = vpop.f32.mrf.mxu0
      %v2181 = vadd.f32 %v2068, %v2180
      %2182 = vmatmul.f32.gmra.mxu0 %v1120
      %v2183 = vpop.f32.mrf.mxu0
      %v2184 = vadd.f32 %v2071, %v2183
      %2185 = vmatmul.f32.gmra.mxu0 %v1129
      %v2186 = vpop.f32.mrf.mxu0
      %v2187 = vadd.f32 %v2074, %v2186
      %2188 = vmatmul.f32.gmra.mxu0 %v1138
      %v2189 = vpop.f32.mrf.mxu0
      %v2190 = vadd.f32 %v2077, %v2189
      %2191 = vdwg.mxu0
      %2192 = vmatpush.msra.mxu0 %v1283
      %2193 = vmatpush.msra.mxu0 %v1282
      %2194 = vmatpush.msra.mxu0 %v1281
      %2195 = vmatpush.msra.mxu0 %v1280
      %2196 = vmatpush.msra.mxu0 %v1279
      %2197 = vmatpush.msra.mxu0 %v1278
      %2198 = vmatpush.msra.mxu0 %v1277
      %2199 = vmatpush.msra.mxu0 %v1276
      %2200 = vmatpush.msra.mxu0 %v1275
      %2201 = vmatpush.msra.mxu0 %v1274
      %2202 = vmatpush.msra.mxu0 %v1273
      %2203 = vmatpush.msra.mxu0 %v1272
      %2204 = vmatpush.msra.mxu0 %v1271
      %2205 = vmatpush.msra.mxu0 %v1270
      %2206 = vmatpush.msra.mxu0 %v1269
      %2207 = vmatpush.msra.mxu0 %v1268
      %2208 = vmatmul.f32.gmra.mxu0 %v860
      %v2209 = vpop.f32.mrf.mxu0
      %v2210 = vadd.f32 %v2097, %v2209
      %2211 = vmatmul.f32.gmra.mxu0 %v869
      %v2212 = vpop.f32.mrf.mxu0
      %v2213 = vadd.f32 %v2100, %v2212
      %2214 = vmatmul.f32.gmra.mxu0 %v878
      %v2215 = vpop.f32.mrf.mxu0
      %v2216 = vadd.f32 %v2103, %v2215
      %2217 = vmatmul.f32.gmra.mxu0 %v887
      %v2218 = vpop.f32.mrf.mxu0
      %v2219 = vadd.f32 %v2106, %v2218
      %2220 = vmatmul.f32.gmra.mxu0 %v896
      %v2221 = vpop.f32.mrf.mxu0
      %v2222 = vadd.f32 %v2109, %v2221
      %2223 = vmatmul.f32.gmra.mxu0 %v905
      %v2224 = vpop.f32.mrf.mxu0
      %v2225 = vadd.f32 %v2112, %v2224
      %2226 = vmatmul.f32.gmra.mxu0 %v914
      %v2227 = vpop.f32.mrf.mxu0
      %v2228 = vadd.f32 %v2115, %v2227
      %2229 = vmatmul.f32.gmra.mxu0 %v923
      %v2230 = vpop.f32.mrf.mxu0
      %v2231 = vadd.f32 %v2118, %v2230
      %2232 = vmatmul.f32.gmra.mxu0 %v932
      %v2233 = vpop.f32.mrf.mxu0
      %v2234 = vadd.f32 %v2121, %v2233
      %2235 = vmatmul.f32.gmra.mxu0 %v941
      %v2236 = vpop.f32.mrf.mxu0
      %v2237 = vadd.f32 %v2124, %v2236
      %2238 = vmatmul.f32.gmra.mxu0 %v950
      %v2239 = vpop.f32.mrf.mxu0
      %v2240 = vadd.f32 %v2127, %v2239
      %2241 = vmatmul.f32.gmra.mxu0 %v959
      %v2242 = vpop.f32.mrf.mxu0
      %v2243 = vadd.f32 %v2130, %v2242
      %2244 = vmatmul.f32.gmra.mxu0 %v968
      %v2245 = vpop.f32.mrf.mxu0
      %v2246 = vadd.f32 %v2133, %v2245
      %2247 = vmatmul.f32.gmra.mxu0 %v977
      %v2248 = vpop.f32.mrf.mxu0
      %v2249 = vadd.f32 %v2136, %v2248
      %2250 = vmatmul.f32.gmra.mxu0 %v986
      %v2251 = vpop.f32.mrf.mxu0
      %v2252 = vadd.f32 %v2139, %v2251
      %2253 = vmatmul.f32.gmra.mxu0 %v995
      %v2254 = vpop.f32.mrf.mxu0
      %v2255 = vadd.f32 %v2142, %v2254
      %2256 = vmatmul.f32.gmra.mxu0 %v1004
      %v2257 = vpop.f32.mrf.mxu0
      %v2258 = vadd.f32 %v2145, %v2257
      %2259 = vmatmul.f32.gmra.mxu0 %v1013
      %v2260 = vpop.f32.mrf.mxu0
      %v2261 = vadd.f32 %v2148, %v2260
      %2262 = vmatmul.f32.gmra.mxu0 %v1022
      %v2263 = vpop.f32.mrf.mxu0
      %v2264 = vadd.f32 %v2151, %v2263
      %2265 = vmatmul.f32.gmra.mxu0 %v1031
      %v2266 = vpop.f32.mrf.mxu0
      %v2267 = vadd.f32 %v2154, %v2266
      %2268 = vmatmul.f32.gmra.mxu0 %v1040
      %v2269 = vpop.f32.mrf.mxu0
      %v2270 = vadd.f32 %v2157, %v2269
      %2271 = vmatmul.f32.gmra.mxu0 %v1049
      %v2272 = vpop.f32.mrf.mxu0
      %v2273 = vadd.f32 %v2160, %v2272
      %2274 = vmatmul.f32.gmra.mxu0 %v1058
      %v2275 = vpop.f32.mrf.mxu0
      %v2276 = vadd.f32 %v2163, %v2275
      %2277 = vmatmul.f32.gmra.mxu0 %v1067
      %v2278 = vpop.f32.mrf.mxu0
      %v2279 = vadd.f32 %v2166, %v2278
      %2280 = vmatmul.f32.gmra.mxu0 %v1076
      %v2281 = vpop.f32.mrf.mxu0
      %v2282 = vadd.f32 %v2169, %v2281
      %2283 = vmatmul.f32.gmra.mxu0 %v1085
      %v2284 = vpop.f32.mrf.mxu0
      %v2285 = vadd.f32 %v2172, %v2284
      %2286 = vmatmul.f32.gmra.mxu0 %v1094
      %v2287 = vpop.f32.mrf.mxu0
      %v2288 = vadd.f32 %v2175, %v2287
      %2289 = vmatmul.f32.gmra.mxu0 %v1103
      %v2290 = vpop.f32.mrf.mxu0
      %v2291 = vadd.f32 %v2178, %v2290
      %2292 = vmatmul.f32.gmra.mxu0 %v1112
      %v2293 = vpop.f32.mrf.mxu0
      %v2294 = vadd.f32 %v2181, %v2293
      %2295 = vmatmul.f32.gmra.mxu0 %v1121
      %v2296 = vpop.f32.mrf.mxu0
      %v2297 = vadd.f32 %v2184, %v2296
      %2298 = vmatmul.f32.gmra.mxu0 %v1130
      %v2299 = vpop.f32.mrf.mxu0
      %v2300 = vadd.f32 %v2187, %v2299
      %2301 = vmatmul.f32.gmra.mxu0 %v1139
      %v2302 = vpop.f32.mrf.mxu0
      %v2303 = vadd.f32 %v2190, %v2302
      %2304 = vdwg.mxu0
      %vm2305 = vcmask 523264
      %2306 = vst.msk [vmem:[%s170] sm:$0xff] %vm2305, %v2210
      %2307 = vst.msk [vmem:[%s170 + $0x8] sm:$0xff] %vm2305, %v2213
      %2308 = vst.msk [vmem:[%s170 + $0x10] sm:$0xff] %vm2305, %v2216
      %2309 = vst.msk [vmem:[%s170 + $0x18] sm:$0xff] %vm2305, %v2219
      %2310 = vst.msk [vmem:[%s170 + $0x20] sm:$0xff] %vm2305, %v2222
      %2311 = vst.msk [vmem:[%s170 + $0x28] sm:$0xff] %vm2305, %v2225
      %2312 = vst.msk [vmem:[%s170 + $0x30] sm:$0xff] %vm2305, %v2228
      %2313 = vst.msk [vmem:[%s170 + $0x38] sm:$0xff] %vm2305, %v2231
      %2314 = vst.msk [vmem:[%s170 + $0x40] sm:$0xff] %vm2305, %v2234
      %2315 = vst.msk [vmem:[%s170 + $0x48] sm:$0xff] %vm2305, %v2237
      %2316 = vst.msk [vmem:[%s170 + $0x50] sm:$0xff] %vm2305, %v2240
      %2317 = vst.msk [vmem:[%s170 + $0x58] sm:$0xff] %vm2305, %v2243
      %2318 = vst.msk [vmem:[%s170 + $0x60] sm:$0xff] %vm2305, %v2246
      %2319 = vst.msk [vmem:[%s170 + $0x68] sm:$0xff] %vm2305, %v2249
      %2320 = vst.msk [vmem:[%s170 + $0x70] sm:$0xff] %vm2305, %v2252
      %2321 = vst.msk [vmem:[%s170 + $0x78] sm:$0xff] %vm2305, %v2255
      %2322 = vst.msk [vmem:[%s170 + $0x80] sm:$0xff] %vm2305, %v2258
      %2323 = vst.msk [vmem:[%s170 + $0x88] sm:$0xff] %vm2305, %v2261
      %2324 = vst.msk [vmem:[%s170 + $0x90] sm:$0xff] %vm2305, %v2264
      %2325 = vst.msk [vmem:[%s170 + $0x98] sm:$0xff] %vm2305, %v2267
      %2326 = vst.msk [vmem:[%s170 + $0xa0] sm:$0xff] %vm2305, %v2270
      %2327 = vst.msk [vmem:[%s170 + $0xa8] sm:$0xff] %vm2305, %v2273
      %2328 = vst.msk [vmem:[%s170 + $0xb0] sm:$0xff] %vm2305, %v2276
      %2329 = vst.msk [vmem:[%s170 + $0xb8] sm:$0xff] %vm2305, %v2279
      %2330 = vst.msk [vmem:[%s170 + $0xc0] sm:$0xff] %vm2305, %v2282
      %2331 = vst.msk [vmem:[%s170 + $0xc8] sm:$0xff] %vm2305, %v2285
      %2332 = vst.msk [vmem:[%s170 + $0xd0] sm:$0xff] %vm2305, %v2288
      %2333 = vst.msk [vmem:[%s170 + $0xd8] sm:$0xff] %vm2305, %v2291
      %2334 = vst.msk [vmem:[%s170 + $0xe0] sm:$0xff] %vm2305, %v2294
      %2335 = vst.msk [vmem:[%s170 + $0xe8] sm:$0xff] %vm2305, %v2297
      %2336 = vst.msk [vmem:[%s170 + $0xf0] sm:$0xff] %vm2305, %v2300
      %2337 = vst.msk [vmem:[%s170 + $0xf8] sm:$0xff] %vm2305, %v2303
      %p2338 = scmp.lt.s32.totalorder %s14, 1
      %s2339 = scalar_select %p2338, %s14, 1
      %s2340 = smul.addr %s2339, 32
      %s2341 = smul.addr %s2340, 8
      %s2342 = scalar_lea.vmem %s3, %s2341
      // Predicated region
      $region33: #{tpu_custom_call.1} parent=31 // pred_check
        %p2343 = pneg %p100
      $region34: #{tpu_custom_call.1} parent=31 // pred_check_branch
        %2345 = sbr.rel (%p2343) target = $region36
      $region35: #{tpu_custom_call.1} parent=31 // pred_region
        _
      $region36: #{tpu_custom_call.1} parent=31 // pred_fallthru
        _
    $region32: #{tpu_custom_call.1} parent=5 // pred_fallthru
      _
    %p2346 = scmp.le.s32.totalorder 2, %s9
    // Predicated region
    $region37: #{tpu_custom_call.1} parent=5 // pred_check
      %p2347 = pneg %p2346
    $region38: #{tpu_custom_call.1} parent=5 // pred_check_branch
      %2349 = sbr.rel (%p2347) target = $region40
    $region39: #{tpu_custom_call.1} parent=5 // pred_region
      %s2350 = ssub.s32 %s9, 2
      // Predicated region
      $region41: #{tpu_custom_call.1} parent=39 // pred_check
        %p2351 = pneg %p106
      $region42: #{tpu_custom_call.1} parent=39 // pred_check_branch
        %2353 = sbr.rel (%p2351) target = $region44
      $region43: #{tpu_custom_call.1} parent=39 // pred_region
        %p2354 = scmp.lt.s32.totalorder %s15, 1
        %s2355 = scalar_select %p2354, %s15, 1
        %s2356 = smul.addr %s2355, 32
        %s2357 = smul.addr %s2356, 8
        %s2358 = scalar_lea.vmem %s3, %s2357
      $region44: #{tpu_custom_call.1} parent=39 // pred_fallthru
        _
    $region40: #{tpu_custom_call.1} parent=5 // pred_fallthru
      _
  $region6: #{tpu_custom_call.1} parent=0 // loop_footer
    %s13 = sadd.s32 1, %s9
  $region7: #{tpu_custom_call.1} parent=0 // loop_footer_branch
    %8 = sbr.rel target = $region3
  $region8: #{tpu_custom_call.1} parent=0 // loop_exit
    _

</llo_original>
